<compile_context>
chip_gen: v7x
topology: tpu7x:2x2x1
jax: 0.10.0
libtpu: 0.0.40
codegen_flags: <defaults>
</compile_context>

<pallas_src>
import math
import functools

import jax
import jax.numpy as jnp
import numpy as np
from jax import lax
from jax.experimental import pallas as pl
from jax.experimental.pallas import tpu as pltpu


# --------------------------- tiling configuration --------------------------- #

# Caps sized for v7x's 64 MiB VMEM per TensorCore with double-buffered inputs
# (also comfortably within v5e/v6e's 128 MiB).
TM_CAP = 256      # activation rows per block
TN_CAP = 256      # output columns per block
TK_CAP = 512      # contraction depth per block
TQ_CAP = 256      # query tile for flash attention
TKV_CAP = 256     # kv tile for flash attention
VMEM_LIMIT = 64 * 1024 * 1024


def _pick_tile(dim, cap):
    """Largest divisor of `dim` not exceeding `cap` (full dim when it already fits)."""
    if dim <= cap:
        return dim
    t = cap
    while dim % t:
        t //= 2
    return max(t, 1)


# ----------------------------- Pallas kernels ------------------------------ #

def _rms_scale_kernel(x_ref, o_ref, *, eps):
    """Per-row inverse RMS: rsqrt(mean(x^2) + eps), output [tm, 1] fp32."""
    x = x_ref[...].astype(jnp.float32)
    var = jnp.mean(x * x, axis=-1, keepdims=True)
    o_ref[...] = lax.rsqrt(var + eps)


def pallas_rms_scale(x, eps=1e-5):
    M, D = x.shape
    tm = _pick_tile(M, 512)
    return pl.pallas_call(
        functools.partial(_rms_scale_kernel, eps=eps),
        out_shape=jax.ShapeDtypeStruct((M, 1), jnp.float32),
        grid=(M // tm,),
        in_specs=[pl.BlockSpec((tm, D), lambda i: (i, 0))],
        out_specs=pl.BlockSpec((tm, 1), lambda i: (i, 0)),
        compiler_params=pltpu.CompilerParams(
            dimension_semantics=("parallel",),
            vmem_limit_bytes=VMEM_LIMIT),
    )(x)


def _norm_matmul_kernel(x_ref, s_ref, g_ref, w_ref, o_ref, acc_ref):
    """out = ((x * inv_rms) * gamma) @ w, K-tiled with fp32 accumulator."""
    @pl.when(pl.program_id(2) == 0)
    def _():
        acc_ref[...] = jnp.zeros(acc_ref.shape, jnp.float32)

    xn = (x_ref[...].astype(jnp.float32)
          * s_ref[...]
          * g_ref[...].astype(jnp.float32)).astype(x_ref.dtype)
    acc_ref[...] += jnp.dot(xn, w_ref[...], preferred_element_type=jnp.float32)

    @pl.when(pl.program_id(2) == pl.num_programs(2) - 1)
    def _():
        o_ref[...] = acc_ref[...].astype(o_ref.dtype)


def pallas_norm_matmul(x, inv_rms, gamma, w):
    M, K = x.shape
    _, N = w.shape
    tm, tn, tk = _pick_tile(M, TM_CAP), _pick_tile(N, TN_CAP), _pick_tile(K, TK_CAP)
    return pl.pallas_call(
        _norm_matmul_kernel,
        out_shape=jax.ShapeDtypeStruct((M, N), x.dtype),
        grid=(M // tm, N // tn, K // tk),
        in_specs=[
            pl.BlockSpec((tm, tk), lambda i, j, k: (i, k)),
            pl.BlockSpec((tm, 1),  lambda i, j, k: (i, 0)),
            pl.BlockSpec((1, tk),  lambda i, j, k: (0, k)),
            pl.BlockSpec((tk, tn), lambda i, j, k: (k, j)),
        ],
        out_specs=pl.BlockSpec((tm, tn), lambda i, j, k: (i, j)),
        scratch_shapes=[pltpu.VMEM((tm, tn), jnp.float32)],
        compiler_params=pltpu.CompilerParams(
            dimension_semantics=("parallel", "parallel", "arbitrary"),
            vmem_limit_bytes=VMEM_LIMIT),
    )(x, inv_rms, gamma.reshape(1, K), w)


def _norm_gateup_swiglu_kernel(x_ref, s_ref, g_ref, wg_ref, wu_ref, o_ref,
                               accg_ref, accu_ref):
    """act = silu(xn @ wg) * (xn @ wu) with xn = x*inv_rms*gamma; SwiGLU in epilogue."""
    @pl.when(pl.program_id(2) == 0)
    def _():
        accg_ref[...] = jnp.zeros(accg_ref.shape, jnp.float32)
        accu_ref[...] = jnp.zeros(accu_ref.shape, jnp.float32)

    xn = (x_ref[...].astype(jnp.float32)
          * s_ref[...]
          * g_ref[...].astype(jnp.float32)).astype(x_ref.dtype)
    accg_ref[...] += jnp.dot(xn, wg_ref[...], preferred_element_type=jnp.float32)
    accu_ref[...] += jnp.dot(xn, wu_ref[...], preferred_element_type=jnp.float32)

    @pl.when(pl.program_id(2) == pl.num_programs(2) - 1)
    def _():
        gmat = accg_ref[...]
        o_ref[...] = (gmat * jax.nn.sigmoid(gmat) * accu_ref[...]).astype(o_ref.dtype)


def pallas_norm_gateup_swiglu(x, inv_rms, gamma, wg, wu):
    M, K = x.shape
    _, N = wg.shape
    tm, tn, tk = _pick_tile(M, TM_CAP), _pick_tile(N, TN_CAP), _pick_tile(K, TK_CAP)
    return pl.pallas_call(
        _norm_gateup_swiglu_kernel,
        out_shape=jax.ShapeDtypeStruct((M, N), x.dtype),
        grid=(M // tm, N // tn, K // tk),
        in_specs=[
            pl.BlockSpec((tm, tk), lambda i, j, k: (i, k)),
            pl.BlockSpec((tm, 1),  lambda i, j, k: (i, 0)),
            pl.BlockSpec((1, tk),  lambda i, j, k: (0, k)),
            pl.BlockSpec((tk, tn), lambda i, j, k: (k, j)),
            pl.BlockSpec((tk, tn), lambda i, j, k: (k, j)),
        ],
        out_specs=pl.BlockSpec((tm, tn), lambda i, j, k: (i, j)),
        scratch_shapes=[pltpu.VMEM((tm, tn), jnp.float32),
                        pltpu.VMEM((tm, tn), jnp.float32)],
        compiler_params=pltpu.CompilerParams(
            dimension_semantics=("parallel", "parallel", "arbitrary"),
            vmem_limit_bytes=VMEM_LIMIT),
    )(x, inv_rms, gamma.reshape(1, K), wg, wu)


def _matmul_residual_kernel(x_ref, w_ref, r_ref, o_ref, acc_ref):
    """out = x @ w + residual; residual add fused into the finalize epilogue."""
    @pl.when(pl.program_id(2) == 0)
    def _():
        acc_ref[...] = jnp.zeros(acc_ref.shape, jnp.float32)

    acc_ref[...] += jnp.dot(x_ref[...], w_ref[...], preferred_element_type=jnp.float32)

    @pl.when(pl.program_id(2) == pl.num_programs(2) - 1)
    def _():
        o_ref[...] = (acc_ref[...] + r_ref[...].astype(jnp.float32)).astype(o_ref.dtype)


def pallas_matmul_residual(x, w, residual):
    M, K = x.shape
    _, N = w.shape
    tm, tn, tk = _pick_tile(M, TM_CAP), _pick_tile(N, TN_CAP), _pick_tile(K, TK_CAP)
    return pl.pallas_call(
        _matmul_residual_kernel,
        out_shape=jax.ShapeDtypeStruct((M, N), residual.dtype),
        grid=(M // tm, N // tn, K // tk),
        in_specs=[
            pl.BlockSpec((tm, tk), lambda i, j, k: (i, k)),
            pl.BlockSpec((tk, tn), lambda i, j, k: (k, j)),
            pl.BlockSpec((tm, tn), lambda i, j, k: (i, j)),
        ],
        out_specs=pl.BlockSpec((tm, tn), lambda i, j, k: (i, j)),
        scratch_shapes=[pltpu.VMEM((tm, tn), jnp.float32)],
        compiler_params=pltpu.CompilerParams(
            dimension_semantics=("parallel", "parallel", "arbitrary"),
            vmem_limit_bytes=VMEM_LIMIT),
    )(x, w, residual)


def _rope_rotate(x, cos, sin):
    # x, cos, sin: (T, hd) fp32.  rotate_half via slice + concat (vreg-level ops).
    # TODO(synk): at production head_dim=128 use pltpu.roll(x, hd//2, -1) + sign mask
    #             (runs on the idle XLU slot) instead of the concat.
    hd = x.shape[-1]
    x1 = x[:, : hd // 2]
    x2 = x[:, hd // 2:]
    rot = jnp.concatenate([-x2, x1], axis=-1)
    return x * cos + rot * sin


def _flash_attn_kernel(q_ref, k_ref, v_ref, m4_ref,
                       cq_ref, sq_ref, ck_ref, sk_ref,
                       o_ref, m_sc, l_sc, acc_sc, *, scale):
    ki = pl.program_id(3)

    @pl.when(ki == 0)
    def _():
        m_sc[...] = jnp.full(m_sc.shape, -jnp.inf, jnp.float32)
        l_sc[...] = jnp.zeros(l_sc.shape, jnp.float32)
        acc_sc[...] = jnp.zeros(acc_sc.shape, jnp.float32)

    # RoPE fused into the attention prologue (q/k never round-trip through HBM rotated)
    q = _rope_rotate(q_ref[0, 0].astype(jnp.float32),
                     cq_ref[0].astype(jnp.float32), sq_ref[0].astype(jnp.float32))
    k = _rope_rotate(k_ref[0, 0].astype(jnp.float32),
                     ck_ref[0].astype(jnp.float32), sk_ref[0].astype(jnp.float32))
    v = v_ref[0, 0].astype(jnp.float32)
    bias = m4_ref[0, 0].astype(jnp.float32)       # (tq, tkv) additive mask tile

    # Contract head_dim directly (no in-kernel k.T relayout).
    s = lax.dot_general(q, k, (((1,), (1,)), ((), ())),
                        preferred_element_type=jnp.float32) * scale + bias

    m_prev = m_sc[...]
    m_new = jnp.maximum(m_prev, jnp.max(s, axis=-1, keepdims=True))
    alpha = jnp.exp(m_prev - m_new)
    p = jnp.exp(s - m_new)
    l_sc[...] = alpha * l_sc[...] + jnp.sum(p, axis=-1, keepdims=True)
    acc_sc[...] = alpha * acc_sc[...] + jnp.dot(p, v, preferred_element_type=jnp.float32)
    m_sc[...] = m_new

    @pl.when(ki == pl.num_programs(3) - 1)
    def _():
        # exact reciprocal keeps the fp32 toy test within 1e-4 of the reference;
        # flip approx=True (EUP slot, ~free) once running bf16 production precision.
        inv_l = pl.reciprocal(l_sc[...], approx=False)
        o_ref[0, 0] = (acc_sc[...] * inv_l).astype(o_ref.dtype)


def pallas_flash_attention(q, k, v, mask4d, cos, sin):
    # q, k, v: [B, H, S, hd]; mask4d: [B, 1, S, S] additive; cos/sin: [B, S, hd]
    B, H, S, hd = q.shape
    tq = _pick_tile(S, TQ_CAP)
    tkv = _pick_tile(S, TKV_CAP)
    scale = 1.0 / math.sqrt(hd)
    return pl.pallas_call(
        functools.partial(_flash_attn_kernel, scale=scale),
        out_shape=jax.ShapeDtypeStruct((B, H, S, hd), q.dtype),
        grid=(B, H, S // tq, S // tkv),
        in_specs=[
            pl.BlockSpec((1, 1, tq, hd),  lambda b, h, qi, ki: (b, h, qi, 0)),
            pl.BlockSpec((1, 1, tkv, hd), lambda b, h, qi, ki: (b, h, ki, 0)),
            pl.BlockSpec((1, 1, tkv, hd), lambda b, h, qi, ki: (b, h, ki, 0)),
            pl.BlockSpec((1, 1, tq, tkv), lambda b, h, qi, ki: (b, 0, qi, ki)),
            pl.BlockSpec((1, tq, hd),     lambda b, h, qi, ki: (b, qi, 0)),
            pl.BlockSpec((1, tq, hd),     lambda b, h, qi, ki: (b, qi, 0)),
            pl.BlockSpec((1, tkv, hd),    lambda b, h, qi, ki: (b, ki, 0)),
            pl.BlockSpec((1, tkv, hd),    lambda b, h, qi, ki: (b, ki, 0)),
        ],
        out_specs=pl.BlockSpec((1, 1, tq, hd), lambda b, h, qi, ki: (b, h, qi, 0)),
        scratch_shapes=[pltpu.VMEM((tq, 1), jnp.float32),
                        pltpu.VMEM((tq, 1), jnp.float32),
                        pltpu.VMEM((tq, hd), jnp.float32)],
        compiler_params=pltpu.CompilerParams(
            dimension_semantics=("parallel", "parallel", "parallel", "arbitrary"),
            vmem_limit_bytes=VMEM_LIMIT),
    )(q, k, v, mask4d, cos, sin, cos, sin)


# ------------------------------ Plain-JAX glue ------------------------------ #

def rotate_half(x):
    hd = x.shape[-1]
    x1, x2 = x[..., : hd // 2], x[..., hd // 2:]
    return jnp.concatenate([-x2, x1], axis=-1)


def apply_rope(x, cos, sin):
    # x: [B, H, S, hd]; cos/sin: [B, S, hd]   (used by the pure-JAX reference only)
    cos = cos[:, None, :, :]
    sin = sin[:, None, :, :]
    return x * cos + rotate_half(x) * sin


def rope_cos_sin(position_ids, head_dim, theta=10000.0):
    # position_ids: [B, S] int32
    inv_freq = 1.0 / (theta ** (jnp.arange(0, head_dim, 2, dtype=jnp.float32) / head_dim))
    ang = position_ids.astype(jnp.float32)[..., None] * inv_freq[None, None, :]  # [B,S,hd/2]
    emb = jnp.concatenate([ang, ang], axis=-1)                                   # [B,S,hd]
    return jnp.cos(emb), jnp.sin(emb)


@functools.partial(jax.jit, static_argnums=(5, 6))
def decoder_layer(hidden, mask4d, cos, sin, p, num_heads, head_dim):
    B, S, D = hidden.shape
    M = B * S
    x2d = hidden.reshape(M, D)

    # --- self-attention block ---
    inv_rms1 = pallas_rms_scale(x2d)                                   # [M,1] f32
    qkv = pallas_norm_matmul(x2d, inv_rms1, p["ln1"], p["wqkv"])       # fused norm+QKV
    q, k, v = jnp.split(qkv, 3, axis=-1)

    # Layout glue to per-head [B,H,S,hd].  At production head_dim=128 this transpose
    # can be replaced by per-head column slicing in the attention BlockSpec index_map.
    def to_heads(t):
        return t.reshape(B, S, num_heads, head_dim).transpose(0, 2, 1, 3)

    attn = pallas_flash_attention(to_heads(q), to_heads(k), to_heads(v),
                                  mask4d, cos, sin)                    # RoPE in-kernel
    attn2d = attn.transpose(0, 2, 1, 3).reshape(M, D)
    h = pallas_matmul_residual(attn2d, p["wo"], x2d)                   # + residual fused

    # --- MLP block ---
    inv_rms2 = pallas_rms_scale(h)
    act = pallas_norm_gateup_swiglu(h, inv_rms2, p["ln2"], p["wg"], p["wu"])
    h = pallas_matmul_residual(act, p["wd"], h)                        # + residual fused
    return h.reshape(B, S, D)


class LanguageModelLayerWrapper:
    """JAX/Pallas port: iterates decoder layers, passes the rest of the tuple through."""

    def __init__(self, layer_params, num_heads, head_dim):
        self.num_heads = num_heads
        self.head_dim = head_dim
        # Fuse Q/K/V projection weights once so each layer does a single wide matmul.
        self.layer_params = [
            dict(p, wqkv=jnp.concatenate([p["wq"], p["wk"], p["wv"]], axis=1))
            for p in layer_params
        ]

    def forward(self, inputs):
        hidden_states, attention_mask, attention_mask_4d, position_ids, labels = inputs
        cos, sin = rope_cos_sin(position_ids, self.head_dim)
        for p in self.layer_params:
            hidden_states = decoder_layer(
                hidden_states, attention_mask_4d, cos, sin, p,
                self.num_heads, self.head_dim)
        return (hidden_states, attention_mask, attention_mask_4d, position_ids, labels)


# --------------------------- Reference (pure JAX) --------------------------- #

def _ref_layer(hidden, mask4d, cos, sin, p, num_heads, head_dim):
    B, S, D = hidden.shape
    x2d = hidden.reshape(B * S, D)

    def rms(x, w):
        var = jnp.mean(x * x, axis=-1, keepdims=True)
        return x * lax.rsqrt(var + 1e-5) * w

    normed = rms(x2d, p["ln1"])
    q = (normed @ p["wq"]).reshape(B, S, num_heads, head_dim).transpose(0, 2, 1, 3)
    k = (normed @ p["wk"]).reshape(B, S, num_heads, head_dim).transpose(0, 2, 1, 3)
    v = (normed @ p["wv"]).reshape(B, S, num_heads, head_dim).transpose(0, 2, 1, 3)
    q, k = apply_rope(q, cos, sin), apply_rope(k, cos, sin)
    s = jnp.einsum("bhqd,bhkd->bhqk", q, k) / math.sqrt(head_dim) + mask4d
    pmat = jax.nn.softmax(s, axis=-1)
    attn = jnp.einsum("bhqk,bhkd->bhqd", pmat, v).transpose(0, 2, 1, 3).reshape(B * S, D)
    h = x2d + attn @ p["wo"]
    normed2 = rms(h, p["ln2"])
    g, u = normed2 @ p["wg"], normed2 @ p["wu"]
    h = h + (g * jax.nn.sigmoid(g) * u) @ p["wd"]
    return h.reshape(B, S, D)


# ----------------------------------- Main ----------------------------------- #

if __name__ == "__main__":
    B, S, D = 2, 8, 32
    H, HD = 2, 16                # num_heads, head_dim (H * HD == D)
    I = 64                       # MLP intermediate size
    NUM_LAYERS = 2

    key = jax.random.PRNGKey(0)

    def init_layer(k):
        ks = jax.random.split(k, 9)
        scale = 0.02
        return {
            "ln1": jnp.ones((D,), jnp.float32),
            "ln2": jnp.ones((D,), jnp.float32),
            "wq": scale * jax.random.normal(ks[0], (D, D), jnp.float32),
            "wk": scale * jax.random.normal(ks[1], (D, D), jnp.float32),
            "wv": scale * jax.random.normal(ks[2], (D, D), jnp.float32),
            "wo": scale * jax.random.normal(ks[3], (D, D), jnp.float32),
            "wg": scale * jax.random.normal(ks[4], (D, I), jnp.float32),
            "wu": scale * jax.random.normal(ks[5], (D, I), jnp.float32),
            "wd": scale * jax.random.normal(ks[6], (I, D), jnp.float32),
        }

    key, *layer_keys = jax.random.split(key, NUM_LAYERS + 1)
    layer_params = [init_layer(k) for k in layer_keys]

    key, hk = jax.random.split(key)
    hidden_states = jax.random.normal(hk, (B, S, D), jnp.float32)
    attention_mask = jnp.ones((B, S), jnp.int32)
    # 4-D additive causal mask, as produced by HF _prepare_4d_causal_attention_mask
    causal = jnp.tril(jnp.ones((S, S), jnp.bool_))
    attention_mask_4d = jnp.where(causal, 0.0, -1e9).astype(jnp.float32)[None, None]
    attention_mask_4d = jnp.broadcast_to(attention_mask_4d, (B, 1, S, S))
    position_ids = jnp.broadcast_to(jnp.arange(S, dtype=jnp.int32)[None, :], (B, S))
    labels = jax.random.randint(key, (B, S), 0, 1000, dtype=jnp.int32)

    wrapper = LanguageModelLayerWrapper(layer_params, H, HD)
    inputs = (hidden_states, attention_mask, attention_mask_4d, position_ids, labels)
    outputs = wrapper.forward(inputs)
    out_hidden = jax.block_until_ready(outputs[0])

    # cross-check against a pure-JAX reference of the same layers
    cos, sin = rope_cos_sin(position_ids, HD)
    ref = hidden_states
    for p in layer_params:
        ref = _ref_layer(ref, attention_mask_4d, cos, sin, p, H, HD)
    np.testing.assert_allclose(np.asarray(out_hidden), np.asarray(ref),
                               rtol=1e-4, atol=1e-4)

    print("KERNEL_OK")
</pallas_src>

<mosaic_0001>
module attributes {stable_mosaic.version = 11 : i64} {
  func.func @_norm_matmul_kernel(%arg0: i32, %arg1: i32, %arg2: i32, %arg3: memref<16x32xf32, #tpu.memory_space<vmem>>, %arg4: memref<16x1xf32, #tpu.memory_space<vmem>>, %arg5: memref<1x32xf32, #tpu.memory_space<vmem>>, %arg6: memref<32x96xf32, #tpu.memory_space<vmem>>, %arg7: memref<16x96xf32, #tpu.memory_space<vmem>>, %arg8: memref<16x96xf32, #tpu.memory_space<vmem>>) attributes {dimension_semantics = [#tpu.dimension_semantics<parallel>, #tpu.dimension_semantics<parallel>, #tpu.dimension_semantics<arbitrary>], iteration_bounds = array<i64: 1, 1, 1>, scalar_prefetch = 0 : i64, scratch_operands = 1 : i64, tpu.core_type = #tpu.core_type<tc>, window_params = [{transform_indices = @transform_0, window_bounds = array<i64: 16, 32>}, {transform_indices = @transform_1, window_bounds = array<i64: 16, 1>}, {transform_indices = @transform_2, window_bounds = array<i64: 1, 32>}, {transform_indices = @transform_3, window_bounds = array<i64: 32, 96>}, {transform_indices = @transform_4, window_bounds = array<i64: 16, 96>}]} {
    %c0_i32 = arith.constant 0 : i32
    %0 = arith.cmpi eq, %arg2, %c0_i32 : i32
    %1 = arith.extui %0 : i1 to i32
    %c0_i32_0 = arith.constant 0 : i32
    %2 = arith.cmpi ne, %1, %c0_i32_0 : i32
    scf.if %2 {
      %cst_14 = arith.constant 0.000000e+00 : f32
      %18 = vector.broadcast %cst_14 : f32 to vector<16x96xf32>
      %c0_15 = arith.constant 0 : index
      %c0_16 = arith.constant 0 : index
      %19 = vector.load %arg8[%c0_15, %c0_16] : memref<16x96xf32, #tpu.memory_space<vmem>>, vector<16x96xf32>
      tpu.vector_store %arg8[%c0_15, %c0_16], %18 {strides = array<i32>} : memref<16x96xf32, #tpu.memory_space<vmem>>, vector<16x96xf32>,
    } else {
    }
    %c0 = arith.constant 0 : index
    %c0_1 = arith.constant 0 : index
    %3 = vector.load %arg3[%c0, %c0_1] : memref<16x32xf32, #tpu.memory_space<vmem>>, vector<16x32xf32>
    %c0_2 = arith.constant 0 : index
    %c0_3 = arith.constant 0 : index
    %4 = vector.load %arg4[%c0_2, %c0_3] : memref<16x1xf32, #tpu.memory_space<vmem>>, vector<16x1xf32>
    %5 = vector.broadcast %4 : vector<16x1xf32> to vector<16x32xf32>
    %6 = arith.mulf %3, %5 : vector<16x32xf32>
    %c0_4 = arith.constant 0 : index
    %c0_5 = arith.constant 0 : index
    %7 = vector.load %arg5[%c0_4, %c0_5] : memref<1x32xf32, #tpu.memory_space<vmem>>, vector<1x32xf32>
    %8 = vector.broadcast %7 : vector<1x32xf32> to vector<16x32xf32>
    %9 = arith.mulf %6, %8 : vector<16x32xf32>
    %c0_6 = arith.constant 0 : index
    %c0_7 = arith.constant 0 : index
    %10 = vector.load %arg8[%c0_6, %c0_7] : memref<16x96xf32, #tpu.memory_space<vmem>>, vector<16x96xf32>
    %c0_8 = arith.constant 0 : index
    %c0_9 = arith.constant 0 : index
    %11 = vector.load %arg6[%c0_8, %c0_9] : memref<32x96xf32, #tpu.memory_space<vmem>>, vector<32x96xf32>
    %cst = arith.constant dense<0.000000e+00> : vector<16x96xf32>
    %12 = tpu.matmul %9, %11, %cst {dimension_numbers = #tpu.dot_dimension_numbers<[1], [0], [0], [1], [0, 0, 1, 1], [], []>} : vector<16x32xf32>, vector<32x96xf32>, vector<16x96xf32> -> vector<16x96xf32>
    %13 = arith.addf %10, %12 : vector<16x96xf32>
    %c0_10 = arith.constant 0 : index
    %c0_11 = arith.constant 0 : index
    %14 = vector.load %arg8[%c0_10, %c0_11] : memref<16x96xf32, #tpu.memory_space<vmem>>, vector<16x96xf32>
    tpu.vector_store %arg8[%c0_10, %c0_11], %13 {strides = array<i32>} : memref<16x96xf32, #tpu.memory_space<vmem>>, vector<16x96xf32>,
    %c0_i32_12 = arith.constant 0 : i32
    %15 = arith.cmpi eq, %arg2, %c0_i32_12 : i32
    %16 = arith.extui %15 : i1 to i32
    %c0_i32_13 = arith.constant 0 : i32
    %17 = arith.cmpi ne, %16, %c0_i32_13 : i32
    scf.if %17 {
      %c0_14 = arith.constant 0 : index
      %c0_15 = arith.constant 0 : index
      %18 = vector.load %arg8[%c0_14, %c0_15] : memref<16x96xf32, #tpu.memory_space<vmem>>, vector<16x96xf32>
      %c0_16 = arith.constant 0 : index
      %c0_17 = arith.constant 0 : index
      %19 = vector.load %arg7[%c0_16, %c0_17] : memref<16x96xf32, #tpu.memory_space<vmem>>, vector<16x96xf32>
      tpu.vector_store %arg7[%c0_16, %c0_17], %18 {strides = array<i32>} : memref<16x96xf32, #tpu.memory_space<vmem>>, vector<16x96xf32>,
    } else {
    }
    return
  }
  func.func @transform_0(%arg0: i32, %arg1: i32, %arg2: i32) -> (i32, i32) {
    %c0_i32 = arith.constant 0 : i32
    return %arg0, %arg2 : i32, i32
  }
  func.func @transform_1(%arg0: i32, %arg1: i32, %arg2: i32) -> (i32, i32) {
    %c0_i32 = arith.constant 0 : i32
    %c0_i32_0 = arith.constant 0 : i32
    return %arg0, %c0_i32 : i32, i32
  }
  func.func @transform_2(%arg0: i32, %arg1: i32, %arg2: i32) -> (i32, i32) {
    %c0_i32 = arith.constant 0 : i32
    %c0_i32_0 = arith.constant 0 : i32
    return %c0_i32, %arg2 : i32, i32
  }
  func.func @transform_3(%arg0: i32, %arg1: i32, %arg2: i32) -> (i32, i32) {
    %c0_i32 = arith.constant 0 : i32
    return %arg2, %arg1 : i32, i32
  }
  func.func @transform_4(%arg0: i32, %arg1: i32, %arg2: i32) -> (i32, i32) {
    %c0_i32 = arith.constant 0 : i32
    return %arg0, %arg1 : i32, i32
  }
}

module attributes {stable_mosaic.version = 11 : i64} {
  func.func @_rms_scale_kernel(%arg0: i32, %arg1: memref<16x32xf32, #tpu.memory_space<vmem>>, %arg2: memref<16x1xf32, #tpu.memory_space<vmem>>) attributes {dimension_semantics = [#tpu.dimension_semantics<parallel>], iteration_bounds = array<i64: 1>, scalar_prefetch = 0 : i64, scratch_operands = 0 : i64, tpu.core_type = #tpu.core_type<tc>, window_params = [{transform_indices = @transform_0, window_bounds = array<i64: 16, 32>}, {transform_indices = @transform_1, window_bounds = array<i64: 16, 1>}]} {
    %c0 = arith.constant 0 : index
    %c0_0 = arith.constant 0 : index
    %0 = vector.load %arg1[%c0, %c0_0] : memref<16x32xf32, #tpu.memory_space<vmem>>, vector<16x32xf32>
    %1 = arith.mulf %0, %0 : vector<16x32xf32>
    %cst = arith.constant dense<0.000000e+00> : vector<16xf32>
    %2 = vector.multi_reduction <add>, %1, %cst [1] : vector<16x32xf32> to vector<16xf32>
    %3 = vector.shape_cast %2 : vector<16xf32> to vector<16x1xf32>
    %cst_1 = arith.constant 3.200000e+01 : f32
    %4 = vector.broadcast %cst_1 : f32 to vector<16x1xf32>
    %5 = arith.divf %3, %4 : vector<16x1xf32>
    %cst_2 = arith.constant 9.99999974E-6 : f32
    %6 = vector.broadcast %cst_2 : f32 to vector<16x1xf32>
    %7 = arith.addf %5, %6 : vector<16x1xf32>
    %8 = math.rsqrt %7 : vector<16x1xf32>
    %c0_3 = arith.constant 0 : index
    %c0_4 = arith.constant 0 : index
    %9 = vector.load %arg2[%c0_3, %c0_4] : memref<16x1xf32, #tpu.memory_space<vmem>>, vector<16x1xf32>
    tpu.vector_store %arg2[%c0_3, %c0_4], %8 {strides = array<i32>} : memref<16x1xf32, #tpu.memory_space<vmem>>, vector<16x1xf32>,
    return
  }
  func.func @transform_0(%arg0: i32) -> (i32, i32) {
    %c0_i32 = arith.constant 0 : i32
    %c0_i32_0 = arith.constant 0 : i32
    return %arg0, %c0_i32 : i32, i32
  }
  func.func @transform_1(%arg0: i32) -> (i32, i32) {
    %c0_i32 = arith.constant 0 : i32
    %c0_i32_0 = arith.constant 0 : i32
    return %arg0, %c0_i32 : i32, i32
  }
}

module attributes {stable_mosaic.version = 11 : i64} {
  func.func @_flash_attn_kernel(%arg0: i32, %arg1: i32, %arg2: i32, %arg3: i32, %arg4: memref<1x1x8x16xf32, #tpu.memory_space<vmem>>, %arg5: memref<1x1x8x16xf32, #tpu.memory_space<vmem>>, %arg6: memref<1x1x8x16xf32, #tpu.memory_space<vmem>>, %arg7: memref<1x1x8x8xf32, #tpu.memory_space<vmem>>, %arg8: memref<1x8x16xf32, #tpu.memory_space<vmem>>, %arg9: memref<1x8x16xf32, #tpu.memory_space<vmem>>, %arg10: memref<1x8x16xf32, #tpu.memory_space<vmem>>, %arg11: memref<1x8x16xf32, #tpu.memory_space<vmem>>, %arg12: memref<1x1x8x16xf32, #tpu.memory_space<vmem>>, %arg13: memref<8x1xf32, #tpu.memory_space<vmem>>, %arg14: memref<8x1xf32, #tpu.memory_space<vmem>>, %arg15: memref<8x16xf32, #tpu.memory_space<vmem>>) attributes {dimension_semantics = [#tpu.dimension_semantics<parallel>, #tpu.dimension_semantics<parallel>, #tpu.dimension_semantics<parallel>, #tpu.dimension_semantics<arbitrary>], iteration_bounds = array<i64: 2, 2, 1, 1>, scalar_prefetch = 0 : i64, scratch_operands = 3 : i64, tpu.core_type = #tpu.core_type<tc>, window_params = [{transform_indices = @transform_0, window_bounds = array<i64: 1, 1, 8, 16>}, {transform_indices = @transform_1, window_bounds = array<i64: 1, 1, 8, 16>}, {transform_indices = @transform_2, window_bounds = array<i64: 1, 1, 8, 16>}, {transform_indices = @transform_3, window_bounds = array<i64: 1, 1, 8, 8>}, {transform_indices = @transform_4, window_bounds = array<i64: 1, 8, 16>}, {transform_indices = @transform_5, window_bounds = array<i64: 1, 8, 16>}, {transform_indices = @transform_6, window_bounds = array<i64: 1, 8, 16>}, {transform_indices = @transform_7, window_bounds = array<i64: 1, 8, 16>}, {transform_indices = @transform_8, window_bounds = array<i64: 1, 1, 8, 16>}]} {
    %c0_i32 = arith.constant 0 : i32
    %0 = arith.cmpi eq, %arg3, %c0_i32 : i32
    %1 = arith.extui %0 : i1 to i32
    %c0_i32_0 = arith.constant 0 : i32
    %2 = arith.cmpi ne, %1, %c0_i32_0 : i32
    scf.if %2 {
      %cst_48 = arith.constant 0xFF800000 : f32
      %64 = vector.broadcast %cst_48 : f32 to vector<8x1xf32>
      %c0_49 = arith.constant 0 : index
      %c0_50 = arith.constant 0 : index
      %65 = vector.load %arg13[%c0_49, %c0_50] : memref<8x1xf32, #tpu.memory_space<vmem>>, vector<8x1xf32>
      tpu.vector_store %arg13[%c0_49, %c0_50], %64 {strides = array<i32>} : memref<8x1xf32, #tpu.memory_space<vmem>>, vector<8x1xf32>,
      %cst_51 = arith.constant 0.000000e+00 : f32
      %66 = vector.broadcast %cst_51 : f32 to vector<8x1xf32>
      %c0_52 = arith.constant 0 : index
      %c0_53 = arith.constant 0 : index
      %67 = vector.load %arg14[%c0_52, %c0_53] : memref<8x1xf32, #tpu.memory_space<vmem>>, vector<8x1xf32>
      tpu.vector_store %arg14[%c0_52, %c0_53], %66 {strides = array<i32>} : memref<8x1xf32, #tpu.memory_space<vmem>>, vector<8x1xf32>,
      %cst_54 = arith.constant 0.000000e+00 : f32
      %68 = vector.broadcast %cst_54 : f32 to vector<8x16xf32>
      %c0_55 = arith.constant 0 : index
      %c0_56 = arith.constant 0 : index
      %69 = vector.load %arg15[%c0_55, %c0_56] : memref<8x16xf32, #tpu.memory_space<vmem>>, vector<8x16xf32>
      tpu.vector_store %arg15[%c0_55, %c0_56], %68 {strides = array<i32>} : memref<8x16xf32, #tpu.memory_space<vmem>>, vector<8x16xf32>,
    } else {
    }
    %c0 = arith.constant 0 : index
    %c0_1 = arith.constant 0 : index
    %c0_2 = arith.constant 0 : index
    %c0_3 = arith.constant 0 : index
    %3 = vector.load %arg4[%c0, %c0_1, %c0_2, %c0_3] : memref<1x1x8x16xf32, #tpu.memory_space<vmem>>, vector<1x1x8x16xf32>
    %4 = vector.shape_cast %3 : vector<1x1x8x16xf32> to vector<8x16xf32>
    %c0_4 = arith.constant 0 : index
    %c0_5 = arith.constant 0 : index
    %c0_6 = arith.constant 0 : index
    %5 = vector.load %arg8[%c0_4, %c0_5, %c0_6] : memref<1x8x16xf32, #tpu.memory_space<vmem>>, vector<1x8x16xf32>
    %6 = vector.shape_cast %5 : vector<1x8x16xf32> to vector<8x16xf32>
    %c0_7 = arith.constant 0 : index
    %c0_8 = arith.constant 0 : index
    %c0_9 = arith.constant 0 : index
    %7 = vector.load %arg9[%c0_7, %c0_8, %c0_9] : memref<1x8x16xf32, #tpu.memory_space<vmem>>, vector<1x8x16xf32>
    %8 = vector.shape_cast %7 : vector<1x8x16xf32> to vector<8x16xf32>
    %9 = vector.extract_strided_slice %4 {offsets = [0, 0], sizes = [8, 8], strides = [1, 1]} : vector<8x16xf32> to vector<8x8xf32>
    %10 = vector.extract_strided_slice %4 {offsets = [0, 8], sizes = [8, 8], strides = [1, 1]} : vector<8x16xf32> to vector<8x8xf32>
    %cst = arith.constant 0.000000e+00 : f32
    %11 = vector.broadcast %cst : f32 to vector<8x8xf32>
    %12 = arith.subf %11, %10 : vector<8x8xf32>
    %13 = tpu.concatenate %12, %9 in 1 : vector<8x8xf32>, vector<8x8xf32> -> vector<8x16xf32>
    %14 = arith.mulf %4, %6 : vector<8x16xf32>
    %15 = arith.mulf %13, %8 : vector<8x16xf32>
    %16 = arith.addf %14, %15 : vector<8x16xf32>
    %c0_10 = arith.constant 0 : index
    %c0_11 = arith.constant 0 : index
    %c0_12 = arith.constant 0 : index
    %c0_13 = arith.constant 0 : index
    %17 = vector.load %arg5[%c0_10, %c0_11, %c0_12, %c0_13] : memref<1x1x8x16xf32, #tpu.memory_space<vmem>>, vector<1x1x8x16xf32>
    %18 = vector.shape_cast %17 : vector<1x1x8x16xf32> to vector<8x16xf32>
    %c0_14 = arith.constant 0 : index
    %c0_15 = arith.constant 0 : index
    %c0_16 = arith.constant 0 : index
    %19 = vector.load %arg10[%c0_14, %c0_15, %c0_16] : memref<1x8x16xf32, #tpu.memory_space<vmem>>, vector<1x8x16xf32>
    %20 = vector.shape_cast %19 : vector<1x8x16xf32> to vector<8x16xf32>
    %c0_17 = arith.constant 0 : index
    %c0_18 = arith.constant 0 : index
    %c0_19 = arith.constant 0 : index
    %21 = vector.load %arg11[%c0_17, %c0_18, %c0_19] : memref<1x8x16xf32, #tpu.memory_space<vmem>>, vector<1x8x16xf32>
    %22 = vector.shape_cast %21 : vector<1x8x16xf32> to vector<8x16xf32>
    %23 = vector.extract_strided_slice %18 {offsets = [0, 0], sizes = [8, 8], strides = [1, 1]} : vector<8x16xf32> to vector<8x8xf32>
    %24 = vector.extract_strided_slice %18 {offsets = [0, 8], sizes = [8, 8], strides = [1, 1]} : vector<8x16xf32> to vector<8x8xf32>
    %cst_20 = arith.constant 0.000000e+00 : f32
    %25 = vector.broadcast %cst_20 : f32 to vector<8x8xf32>
    %26 = arith.subf %25, %24 : vector<8x8xf32>
    %27 = tpu.concatenate %26, %23 in 1 : vector<8x8xf32>, vector<8x8xf32> -> vector<8x16xf32>
    %28 = arith.mulf %18, %20 : vector<8x16xf32>
    %29 = arith.mulf %27, %22 : vector<8x16xf32>
    %30 = arith.addf %28, %29 : vector<8x16xf32>
    %c0_21 = arith.constant 0 : index
    %c0_22 = arith.constant 0 : index
    %c0_23 = arith.constant 0 : index
    %c0_24 = arith.constant 0 : index
    %31 = vector.load %arg6[%c0_21, %c0_22, %c0_23, %c0_24] : memref<1x1x8x16xf32, #tpu.memory_space<vmem>>, vector<1x1x8x16xf32>
    %32 = vector.shape_cast %31 : vector<1x1x8x16xf32> to vector<8x16xf32>
    %c0_25 = arith.constant 0 : index
    %c0_26 = arith.constant 0 : index
    %c0_27 = arith.constant 0 : index
    %c0_28 = arith.constant 0 : index
    %33 = vector.load %arg7[%c0_25, %c0_26, %c0_27, %c0_28] : memref<1x1x8x8xf32, #tpu.memory_space<vmem>>, vector<1x1x8x8xf32>
    %34 = vector.shape_cast %33 : vector<1x1x8x8xf32> to vector<8x8xf32>
    %cst_29 = arith.constant dense<0.000000e+00> : vector<8x8xf32>
    %35 = tpu.matmul %16, %30, %cst_29 {dimension_numbers = #tpu.dot_dimension_numbers<[1], [1], [0], [0], [0, 0, 1, 0], [], []>} : vector<8x16xf32>, vector<8x16xf32>, vector<8x8xf32> -> vector<8x8xf32>
    %cst_30 = arith.constant 2.500000e-01 : f32
    %36 = vector.broadcast %cst_30 : f32 to vector<8x8xf32>
    %37 = arith.mulf %35, %36 : vector<8x8xf32>
    %38 = arith.addf %37, %34 : vector<8x8xf32>
    %c0_31 = arith.constant 0 : index
    %c0_32 = arith.constant 0 : index
    %39 = vector.load %arg13[%c0_31, %c0_32] : memref<8x1xf32, #tpu.memory_space<vmem>>, vector<8x1xf32>
    %cst_33 = arith.constant dense<0xFF800000> : vector<8xf32>
    %40 = vector.multi_reduction <maximumf>, %38, %cst_33 [1] : vector<8x8xf32> to vector<8xf32>
    %41 = vector.shape_cast %40 : vector<8xf32> to vector<8x1xf32>
    %42 = arith.maximumf %39, %41 : vector<8x1xf32>
    %43 = arith.subf %39, %42 : vector<8x1xf32>
    %44 = math.exp %43 : vector<8x1xf32>
    %45 = vector.broadcast %42 : vector<8x1xf32> to vector<8x8xf32>
    %46 = arith.subf %38, %45 : vector<8x8xf32>
    %47 = math.exp %46 : vector<8x8xf32>
    %c0_34 = arith.constant 0 : index
    %c0_35 = arith.constant 0 : index
    %48 = vector.load %arg14[%c0_34, %c0_35] : memref<8x1xf32, #tpu.memory_space<vmem>>, vector<8x1xf32>
    %49 = arith.mulf %44, %48 : vector<8x1xf32>
    %cst_36 = arith.constant dense<0.000000e+00> : vector<8xf32>
    %50 = vector.multi_reduction <add>, %47, %cst_36 [1] : vector<8x8xf32> to vector<8xf32>
    %51 = vector.shape_cast %50 : vector<8xf32> to vector<8x1xf32>
    %52 = arith.addf %49, %51 : vector<8x1xf32>
    %c0_37 = arith.constant 0 : index
    %c0_38 = arith.constant 0 : index
    %53 = vector.load %arg14[%c0_37, %c0_38] : memref<8x1xf32, #tpu.memory_space<vmem>>, vector<8x1xf32>
    tpu.vector_store %arg14[%c0_37, %c0_38], %52 {strides = array<i32>} : memref<8x1xf32, #tpu.memory_space<vmem>>, vector<8x1xf32>,
    %c0_39 = arith.constant 0 : index
    %c0_40 = arith.constant 0 : index
    %54 = vector.load %arg15[%c0_39, %c0_40] : memref<8x16xf32, #tpu.memory_space<vmem>>, vector<8x16xf32>
    %55 = vector.broadcast %44 : vector<8x1xf32> to vector<8x16xf32>
    %56 = arith.mulf %55, %54 : vector<8x16xf32>
    %cst_41 = arith.constant dense<0.000000e+00> : vector<8x16xf32>
    %57 = tpu.matmul %47, %32, %cst_41 {dimension_numbers = #tpu.dot_dimension_numbers<[1], [0], [0], [1], [0, 0, 1, 1], [], []>} : vector<8x8xf32>, vector<8x16xf32>, vector<8x16xf32> -> vector<8x16xf32>
    %58 = arith.addf %56, %57 : vector<8x16xf32>
    %c0_42 = arith.constant 0 : index
    %c0_43 = arith.constant 0 : index
    %59 = vector.load %arg15[%c0_42, %c0_43] : memref<8x16xf32, #tpu.memory_space<vmem>>, vector<8x16xf32>
    tpu.vector_store %arg15[%c0_42, %c0_43], %58 {strides = array<i32>} : memref<8x16xf32, #tpu.memory_space<vmem>>, vector<8x16xf32>,
    %c0_44 = arith.constant 0 : index
    %c0_45 = arith.constant 0 : index
    %60 = vector.load %arg13[%c0_44, %c0_45] : memref<8x1xf32, #tpu.memory_space<vmem>>, vector<8x1xf32>
    tpu.vector_store %arg13[%c0_44, %c0_45], %42 {strides = array<i32>} : memref<8x1xf32, #tpu.memory_space<vmem>>, vector<8x1xf32>,
    %c0_i32_46 = arith.constant 0 : i32
    %61 = arith.cmpi eq, %arg3, %c0_i32_46 : i32
    %62 = arith.extui %61 : i1 to i32
    %c0_i32_47 = arith.constant 0 : i32
    %63 = arith.cmpi ne, %62, %c0_i32_47 : i32
    scf.if %63 {
      %c0_48 = arith.constant 0 : index
      %c0_49 = arith.constant 0 : index
      %64 = vector.load %arg14[%c0_48, %c0_49] : memref<8x1xf32, #tpu.memory_space<vmem>>, vector<8x1xf32>
      %65 = tpu.reciprocal %64 : vector<8x1xf32> -> vector<8x1xf32>
      %c0_50 = arith.constant 0 : index
      %c0_51 = arith.constant 0 : index
      %66 = vector.load %arg15[%c0_50, %c0_51] : memref<8x16xf32, #tpu.memory_space<vmem>>, vector<8x16xf32>
      %67 = vector.broadcast %65 : vector<8x1xf32> to vector<8x16xf32>
      %68 = arith.mulf %66, %67 : vector<8x16xf32>
      %c0_52 = arith.constant 0 : index
      %c0_53 = arith.constant 0 : index
      %c0_54 = arith.constant 0 : index
      %c0_55 = arith.constant 0 : index
      %69 = vector.load %arg12[%c0_52, %c0_53, %c0_54, %c0_55] : memref<1x1x8x16xf32, #tpu.memory_space<vmem>>, vector<1x1x8x16xf32>
      %70 = vector.shape_cast %69 : vector<1x1x8x16xf32> to vector<8x16xf32>
      %71 = vector.shape_cast %68 : vector<8x16xf32> to vector<1x1x8x16xf32>
      tpu.vector_store %arg12[%c0_52, %c0_53, %c0_54, %c0_55], %71 {strides = array<i32>} : memref<1x1x8x16xf32, #tpu.memory_space<vmem>>, vector<1x1x8x16xf32>,
    } else {
    }
    return
  }
  func.func @transform_0(%arg0: i32, %arg1: i32, %arg2: i32, %arg3: i32) -> (i32, i32, i32, i32) {
    %c0_i32 = arith.constant 0 : i32
    %c0_i32_0 = arith.constant 0 : i32
    return %arg0, %arg1, %arg2, %c0_i32 : i32, i32, i32, i32
  }
  func.func @transform_1(%arg0: i32, %arg1: i32, %arg2: i32, %arg3: i32) -> (i32, i32, i32, i32) {
    %c0_i32 = arith.constant 0 : i32
    %c0_i32_0 = arith.constant 0 : i32
    return %arg0, %arg1, %arg3, %c0_i32 : i32, i32, i32, i32
  }
  func.func @transform_2(%arg0: i32, %arg1: i32, %arg2: i32, %arg3: i32) -> (i32, i32, i32, i32) {
    %c0_i32 = arith.constant 0 : i32
    %c0_i32_0 = arith.constant 0 : i32
    return %arg0, %arg1, %arg3, %c0_i32 : i32, i32, i32, i32
  }
  func.func @transform_3(%arg0: i32, %arg1: i32, %arg2: i32, %arg3: i32) -> (i32, i32, i32, i32) {
    %c0_i32 = arith.constant 0 : i32
    %c0_i32_0 = arith.constant 0 : i32
    return %arg0, %c0_i32, %arg2, %arg3 : i32, i32, i32, i32
  }
  func.func @transform_4(%arg0: i32, %arg1: i32, %arg2: i32, %arg3: i32) -> (i32, i32, i32) {
    %c0_i32 = arith.constant 0 : i32
    %c0_i32_0 = arith.constant 0 : i32
    return %arg0, %arg2, %c0_i32 : i32, i32, i32
  }
  func.func @transform_5(%arg0: i32, %arg1: i32, %arg2: i32, %arg3: i32) -> (i32, i32, i32) {
    %c0_i32 = arith.constant 0 : i32
    %c0_i32_0 = arith.constant 0 : i32
    return %arg0, %arg2, %c0_i32 : i32, i32, i32
  }
  func.func @transform_6(%arg0: i32, %arg1: i32, %arg2: i32, %arg3: i32) -> (i32, i32, i32) {
    %c0_i32 = arith.constant 0 : i32
    %c0_i32_0 = arith.constant 0 : i32
    return %arg0, %arg3, %c0_i32 : i32, i32, i32
  }
  func.func @transform_7(%arg0: i32, %arg1: i32, %arg2: i32, %arg3: i32) -> (i32, i32, i32) {
    %c0_i32 = arith.constant 0 : i32
    %c0_i32_0 = arith.constant 0 : i32
    return %arg0, %arg3, %c0_i32 : i32, i32, i32
  }
  func.func @transform_8(%arg0: i32, %arg1: i32, %arg2: i32, %arg3: i32) -> (i32, i32, i32, i32) {
    %c0_i32 = arith.constant 0 : i32
    %c0_i32_0 = arith.constant 0 : i32
    return %arg0, %arg1, %arg2, %c0_i32 : i32, i32, i32, i32
  }
}

module attributes {stable_mosaic.version = 11 : i64} {
  func.func @_matmul_residual_kernel(%arg0: i32, %arg1: i32, %arg2: i32, %arg3: memref<16x32xf32, #tpu.memory_space<vmem>>, %arg4: memref<32x32xf32, #tpu.memory_space<vmem>>, %arg5: memref<16x32xf32, #tpu.memory_space<vmem>>, %arg6: memref<16x32xf32, #tpu.memory_space<vmem>>, %arg7: memref<16x32xf32, #tpu.memory_space<vmem>>) attributes {dimension_semantics = [#tpu.dimension_semantics<parallel>, #tpu.dimension_semantics<parallel>, #tpu.dimension_semantics<arbitrary>], iteration_bounds = array<i64: 1, 1, 1>, scalar_prefetch = 0 : i64, scratch_operands = 1 : i64, tpu.core_type = #tpu.core_type<tc>, window_params = [{transform_indices = @transform_0, window_bounds = array<i64: 16, 32>}, {transform_indices = @transform_1, window_bounds = array<i64: 32, 32>}, {transform_indices = @transform_2, window_bounds = array<i64: 16, 32>}, {transform_indices = @transform_3, window_bounds = array<i64: 16, 32>}]} {
    %c0_i32 = arith.constant 0 : i32
    %0 = arith.cmpi eq, %arg2, %c0_i32 : i32
    %1 = arith.extui %0 : i1 to i32
    %c0_i32_0 = arith.constant 0 : i32
    %2 = arith.cmpi ne, %1, %c0_i32_0 : i32
    scf.if %2 {
      %cst_10 = arith.constant 0.000000e+00 : f32
      %12 = vector.broadcast %cst_10 : f32 to vector<16x32xf32>
      %c0_11 = arith.constant 0 : index
      %c0_12 = arith.constant 0 : index
      %13 = vector.load %arg7[%c0_11, %c0_12] : memref<16x32xf32, #tpu.memory_space<vmem>>, vector<16x32xf32>
      tpu.vector_store %arg7[%c0_11, %c0_12], %12 {strides = array<i32>} : memref<16x32xf32, #tpu.memory_space<vmem>>, vector<16x32xf32>,
    } else {
    }
    %c0 = arith.constant 0 : index
    %c0_1 = arith.constant 0 : index
    %3 = vector.load %arg7[%c0, %c0_1] : memref<16x32xf32, #tpu.memory_space<vmem>>, vector<16x32xf32>
    %c0_2 = arith.constant 0 : index
    %c0_3 = arith.constant 0 : index
    %4 = vector.load %arg3[%c0_2, %c0_3] : memref<16x32xf32, #tpu.memory_space<vmem>>, vector<16x32xf32>
    %c0_4 = arith.constant 0 : index
    %c0_5 = arith.constant 0 : index
    %5 = vector.load %arg4[%c0_4, %c0_5] : memref<32x32xf32, #tpu.memory_space<vmem>>, vector<32x32xf32>
    %cst = arith.constant dense<0.000000e+00> : vector<16x32xf32>
    %6 = tpu.matmul %4, %5, %cst {dimension_numbers = #tpu.dot_dimension_numbers<[1], [0], [0], [1], [0, 0, 1, 1], [], []>} : vector<16x32xf32>, vector<32x32xf32>, vector<16x32xf32> -> vector<16x32xf32>
    %7 = arith.addf %3, %6 : vector<16x32xf32>
    %c0_6 = arith.constant 0 : index
    %c0_7 = arith.constant 0 : index
    %8 = vector.load %arg7[%c0_6, %c0_7] : memref<16x32xf32, #tpu.memory_space<vmem>>, vector<16x32xf32>
    tpu.vector_store %arg7[%c0_6, %c0_7], %7 {strides = array<i32>} : memref<16x32xf32, #tpu.memory_space<vmem>>, vector<16x32xf32>,
    %c0_i32_8 = arith.constant 0 : i32
    %9 = arith.cmpi eq, %arg2, %c0_i32_8 : i32
    %10 = arith.extui %9 : i1 to i32
    %c0_i32_9 = arith.constant 0 : i32
    %11 = arith.cmpi ne, %10, %c0_i32_9 : i32
    scf.if %11 {
      %c0_10 = arith.constant 0 : index
      %c0_11 = arith.constant 0 : index
      %12 = vector.load %arg7[%c0_10, %c0_11] : memref<16x32xf32, #tpu.memory_space<vmem>>, vector<16x32xf32>
      %c0_12 = arith.constant 0 : index
      %c0_13 = arith.constant 0 : index
      %13 = vector.load %arg5[%c0_12, %c0_13] : memref<16x32xf32, #tpu.memory_space<vmem>>, vector<16x32xf32>
      %14 = arith.addf %12, %13 : vector<16x32xf32>
      %c0_14 = arith.constant 0 : index
      %c0_15 = arith.constant 0 : index
      %15 = vector.load %arg6[%c0_14, %c0_15] : memref<16x32xf32, #tpu.memory_space<vmem>>, vector<16x32xf32>
      tpu.vector_store %arg6[%c0_14, %c0_15], %14 {strides = array<i32>} : memref<16x32xf32, #tpu.memory_space<vmem>>, vector<16x32xf32>,
    } else {
    }
    return
  }
  func.func @transform_0(%arg0: i32, %arg1: i32, %arg2: i32) -> (i32, i32) {
    %c0_i32 = arith.constant 0 : i32
    return %arg0, %arg2 : i32, i32
  }
  func.func @transform_1(%arg0: i32, %arg1: i32, %arg2: i32) -> (i32, i32) {
    %c0_i32 = arith.constant 0 : i32
    return %arg2, %arg1 : i32, i32
  }
  func.func @transform_2(%arg0: i32, %arg1: i32, %arg2: i32) -> (i32, i32) {
    %c0_i32 = arith.constant 0 : i32
    return %arg0, %arg1 : i32, i32
  }
  func.func @transform_3(%arg0: i32, %arg1: i32, %arg2: i32) -> (i32, i32) {
    %c0_i32 = arith.constant 0 : i32
    return %arg0, %arg1 : i32, i32
  }
}

module attributes {stable_mosaic.version = 11 : i64} {
  func.func @_norm_gateup_swiglu_kernel(%arg0: i32, %arg1: i32, %arg2: i32, %arg3: memref<16x32xf32, #tpu.memory_space<vmem>>, %arg4: memref<16x1xf32, #tpu.memory_space<vmem>>, %arg5: memref<1x32xf32, #tpu.memory_space<vmem>>, %arg6: memref<32x64xf32, #tpu.memory_space<vmem>>, %arg7: memref<32x64xf32, #tpu.memory_space<vmem>>, %arg8: memref<16x64xf32, #tpu.memory_space<vmem>>, %arg9: memref<16x64xf32, #tpu.memory_space<vmem>>, %arg10: memref<16x64xf32, #tpu.memory_space<vmem>>) attributes {dimension_semantics = [#tpu.dimension_semantics<parallel>, #tpu.dimension_semantics<parallel>, #tpu.dimension_semantics<arbitrary>], iteration_bounds = array<i64: 1, 1, 1>, scalar_prefetch = 0 : i64, scratch_operands = 2 : i64, tpu.core_type = #tpu.core_type<tc>, window_params = [{transform_indices = @transform_0, window_bounds = array<i64: 16, 32>}, {transform_indices = @transform_1, window_bounds = array<i64: 16, 1>}, {transform_indices = @transform_2, window_bounds = array<i64: 1, 32>}, {transform_indices = @transform_3, window_bounds = array<i64: 32, 64>}, {transform_indices = @transform_4, window_bounds = array<i64: 32, 64>}, {transform_indices = @transform_5, window_bounds = array<i64: 16, 64>}]} {
    %c0_i32 = arith.constant 0 : i32
    %0 = arith.cmpi eq, %arg2, %c0_i32 : i32
    %1 = arith.extui %0 : i1 to i32
    %c0_i32_0 = arith.constant 0 : i32
    %2 = arith.cmpi ne, %1, %c0_i32_0 : i32
    scf.if %2 {
      %cst_21 = arith.constant 0.000000e+00 : f32
      %23 = vector.broadcast %cst_21 : f32 to vector<16x64xf32>
      %c0_22 = arith.constant 0 : index
      %c0_23 = arith.constant 0 : index
      %24 = vector.load %arg9[%c0_22, %c0_23] : memref<16x64xf32, #tpu.memory_space<vmem>>, vector<16x64xf32>
      tpu.vector_store %arg9[%c0_22, %c0_23], %23 {strides = array<i32>} : memref<16x64xf32, #tpu.memory_space<vmem>>, vector<16x64xf32>,
      %cst_24 = arith.constant 0.000000e+00 : f32
      %25 = vector.broadcast %cst_24 : f32 to vector<16x64xf32>
      %c0_25 = arith.constant 0 : index
      %c0_26 = arith.constant 0 : index
      %26 = vector.load %arg10[%c0_25, %c0_26] : memref<16x64xf32, #tpu.memory_space<vmem>>, vector<16x64xf32>
      tpu.vector_store %arg10[%c0_25, %c0_26], %25 {strides = array<i32>} : memref<16x64xf32, #tpu.memory_space<vmem>>, vector<16x64xf32>,
    } else {
    }
    %c0 = arith.constant 0 : index
    %c0_1 = arith.constant 0 : index
    %3 = vector.load %arg3[%c0, %c0_1] : memref<16x32xf32, #tpu.memory_space<vmem>>, vector<16x32xf32>
    %c0_2 = arith.constant 0 : index
    %c0_3 = arith.constant 0 : index
    %4 = vector.load %arg4[%c0_2, %c0_3] : memref<16x1xf32, #tpu.memory_space<vmem>>, vector<16x1xf32>
    %5 = vector.broadcast %4 : vector<16x1xf32> to vector<16x32xf32>
    %6 = arith.mulf %3, %5 : vector<16x32xf32>
    %c0_4 = arith.constant 0 : index
    %c0_5 = arith.constant 0 : index
    %7 = vector.load %arg5[%c0_4, %c0_5] : memref<1x32xf32, #tpu.memory_space<vmem>>, vector<1x32xf32>
    %8 = vector.broadcast %7 : vector<1x32xf32> to vector<16x32xf32>
    %9 = arith.mulf %6, %8 : vector<16x32xf32>
    %c0_6 = arith.constant 0 : index
    %c0_7 = arith.constant 0 : index
    %10 = vector.load %arg9[%c0_6, %c0_7] : memref<16x64xf32, #tpu.memory_space<vmem>>, vector<16x64xf32>
    %c0_8 = arith.constant 0 : index
    %c0_9 = arith.constant 0 : index
    %11 = vector.load %arg6[%c0_8, %c0_9] : memref<32x64xf32, #tpu.memory_space<vmem>>, vector<32x64xf32>
    %cst = arith.constant dense<0.000000e+00> : vector<16x64xf32>
    %12 = tpu.matmul %9, %11, %cst {dimension_numbers = #tpu.dot_dimension_numbers<[1], [0], [0], [1], [0, 0, 1, 1], [], []>} : vector<16x32xf32>, vector<32x64xf32>, vector<16x64xf32> -> vector<16x64xf32>
    %13 = arith.addf %10, %12 : vector<16x64xf32>
    %c0_10 = arith.constant 0 : index
    %c0_11 = arith.constant 0 : index
    %14 = vector.load %arg9[%c0_10, %c0_11] : memref<16x64xf32, #tpu.memory_space<vmem>>, vector<16x64xf32>
    tpu.vector_store %arg9[%c0_10, %c0_11], %13 {strides = array<i32>} : memref<16x64xf32, #tpu.memory_space<vmem>>, vector<16x64xf32>,
    %c0_12 = arith.constant 0 : index
    %c0_13 = arith.constant 0 : index
    %15 = vector.load %arg10[%c0_12, %c0_13] : memref<16x64xf32, #tpu.memory_space<vmem>>, vector<16x64xf32>
    %c0_14 = arith.constant 0 : index
    %c0_15 = arith.constant 0 : index
    %16 = vector.load %arg7[%c0_14, %c0_15] : memref<32x64xf32, #tpu.memory_space<vmem>>, vector<32x64xf32>
    %cst_16 = arith.constant dense<0.000000e+00> : vector<16x64xf32>
    %17 = tpu.matmul %9, %16, %cst_16 {dimension_numbers = #tpu.dot_dimension_numbers<[1], [0], [0], [1], [0, 0, 1, 1], [], []>} : vector<16x32xf32>, vector<32x64xf32>, vector<16x64xf32> -> vector<16x64xf32>
    %18 = arith.addf %15, %17 : vector<16x64xf32>
    %c0_17 = arith.constant 0 : index
    %c0_18 = arith.constant 0 : index
    %19 = vector.load %arg10[%c0_17, %c0_18] : memref<16x64xf32, #tpu.memory_space<vmem>>, vector<16x64xf32>
    tpu.vector_store %arg10[%c0_17, %c0_18], %18 {strides = array<i32>} : memref<16x64xf32, #tpu.memory_space<vmem>>, vector<16x64xf32>,
    %c0_i32_19 = arith.constant 0 : i32
    %20 = arith.cmpi eq, %arg2, %c0_i32_19 : i32
    %21 = arith.extui %20 : i1 to i32
    %c0_i32_20 = arith.constant 0 : i32
    %22 = arith.cmpi ne, %21, %c0_i32_20 : i32
    scf.if %22 {
      %c0_21 = arith.constant 0 : index
      %c0_22 = arith.constant 0 : index
      %23 = vector.load %arg9[%c0_21, %c0_22] : memref<16x64xf32, #tpu.memory_space<vmem>>, vector<16x64xf32>
      %24 = arith.negf %23 : vector<16x64xf32>
      %25 = math.exp %24 : vector<16x64xf32>
      %cst_23 = arith.constant 1.000000e+00 : f32
      %26 = vector.broadcast %cst_23 : f32 to vector<16x64xf32>
      %27 = arith.addf %26, %25 : vector<16x64xf32>
      %28 = arith.divf %26, %27 : vector<16x64xf32>
      %29 = arith.mulf %23, %28 : vector<16x64xf32>
      %c0_24 = arith.constant 0 : index
      %c0_25 = arith.constant 0 : index
      %30 = vector.load %arg10[%c0_24, %c0_25] : memref<16x64xf32, #tpu.memory_space<vmem>>, vector<16x64xf32>
      %31 = arith.mulf %29, %30 : vector<16x64xf32>
      %c0_26 = arith.constant 0 : index
      %c0_27 = arith.constant 0 : index
      %32 = vector.load %arg8[%c0_26, %c0_27] : memref<16x64xf32, #tpu.memory_space<vmem>>, vector<16x64xf32>
      tpu.vector_store %arg8[%c0_26, %c0_27], %31 {strides = array<i32>} : memref<16x64xf32, #tpu.memory_space<vmem>>, vector<16x64xf32>,
    } else {
    }
    return
  }
  func.func @transform_0(%arg0: i32, %arg1: i32, %arg2: i32) -> (i32, i32) {
    %c0_i32 = arith.constant 0 : i32
    return %arg0, %arg2 : i32, i32
  }
  func.func @transform_1(%arg0: i32, %arg1: i32, %arg2: i32) -> (i32, i32) {
    %c0_i32 = arith.constant 0 : i32
    %c0_i32_0 = arith.constant 0 : i32
    return %arg0, %c0_i32 : i32, i32
  }
  func.func @transform_2(%arg0: i32, %arg1: i32, %arg2: i32) -> (i32, i32) {
    %c0_i32 = arith.constant 0 : i32
    %c0_i32_0 = arith.constant 0 : i32
    return %c0_i32, %arg2 : i32, i32
  }
  func.func @transform_3(%arg0: i32, %arg1: i32, %arg2: i32) -> (i32, i32) {
    %c0_i32 = arith.constant 0 : i32
    return %arg2, %arg1 : i32, i32
  }
  func.func @transform_4(%arg0: i32, %arg1: i32, %arg2: i32) -> (i32, i32) {
    %c0_i32 = arith.constant 0 : i32
    return %arg2, %arg1 : i32, i32
  }
  func.func @transform_5(%arg0: i32, %arg1: i32, %arg2: i32) -> (i32, i32) {
    %c0_i32 = arith.constant 0 : i32
    return %arg0, %arg1 : i32, i32
  }
}

module attributes {stable_mosaic.version = 11 : i64} {
  func.func @_matmul_residual_kernel(%arg0: i32, %arg1: i32, %arg2: i32, %arg3: memref<16x64xf32, #tpu.memory_space<vmem>>, %arg4: memref<64x32xf32, #tpu.memory_space<vmem>>, %arg5: memref<16x32xf32, #tpu.memory_space<vmem>>, %arg6: memref<16x32xf32, #tpu.memory_space<vmem>>, %arg7: memref<16x32xf32, #tpu.memory_space<vmem>>) attributes {dimension_semantics = [#tpu.dimension_semantics<parallel>, #tpu.dimension_semantics<parallel>, #tpu.dimension_semantics<arbitrary>], iteration_bounds = array<i64: 1, 1, 1>, scalar_prefetch = 0 : i64, scratch_operands = 1 : i64, tpu.core_type = #tpu.core_type<tc>, window_params = [{transform_indices = @transform_0, window_bounds = array<i64: 16, 64>}, {transform_indices = @transform_1, window_bounds = array<i64: 64, 32>}, {transform_indices = @transform_2, window_bounds = array<i64: 16, 32>}, {transform_indices = @transform_3, window_bounds = array<i64: 16, 32>}]} {
    %c0_i32 = arith.constant 0 : i32
    %0 = arith.cmpi eq, %arg2, %c0_i32 : i32
    %1 = arith.extui %0 : i1 to i32
    %c0_i32_0 = arith.constant 0 : i32
    %2 = arith.cmpi ne, %1, %c0_i32_0 : i32
    scf.if %2 {
      %cst_10 = arith.constant 0.000000e+00 : f32
      %12 = vector.broadcast %cst_10 : f32 to vector<16x32xf32>
      %c0_11 = arith.constant 0 : index
      %c0_12 = arith.constant 0 : index
      %13 = vector.load %arg7[%c0_11, %c0_12] : memref<16x32xf32, #tpu.memory_space<vmem>>, vector<16x32xf32>
      tpu.vector_store %arg7[%c0_11, %c0_12], %12 {strides = array<i32>} : memref<16x32xf32, #tpu.memory_space<vmem>>, vector<16x32xf32>,
    } else {
    }
    %c0 = arith.constant 0 : index
    %c0_1 = arith.constant 0 : index
    %3 = vector.load %arg7[%c0, %c0_1] : memref<16x32xf32, #tpu.memory_space<vmem>>, vector<16x32xf32>
    %c0_2 = arith.constant 0 : index
    %c0_3 = arith.constant 0 : index
    %4 = vector.load %arg3[%c0_2, %c0_3] : memref<16x64xf32, #tpu.memory_space<vmem>>, vector<16x64xf32>
    %c0_4 = arith.constant 0 : index
    %c0_5 = arith.constant 0 : index
    %5 = vector.load %arg4[%c0_4, %c0_5] : memref<64x32xf32, #tpu.memory_space<vmem>>, vector<64x32xf32>
    %cst = arith.constant dense<0.000000e+00> : vector<16x32xf32>
    %6 = tpu.matmul %4, %5, %cst {dimension_numbers = #tpu.dot_dimension_numbers<[1], [0], [0], [1], [0, 0, 1, 1], [], []>} : vector<16x64xf32>, vector<64x32xf32>, vector<16x32xf32> -> vector<16x32xf32>
    %7 = arith.addf %3, %6 : vector<16x32xf32>
    %c0_6 = arith.constant 0 : index
    %c0_7 = arith.constant 0 : index
    %8 = vector.load %arg7[%c0_6, %c0_7] : memref<16x32xf32, #tpu.memory_space<vmem>>, vector<16x32xf32>
    tpu.vector_store %arg7[%c0_6, %c0_7], %7 {strides = array<i32>} : memref<16x32xf32, #tpu.memory_space<vmem>>, vector<16x32xf32>,
    %c0_i32_8 = arith.constant 0 : i32
    %9 = arith.cmpi eq, %arg2, %c0_i32_8 : i32
    %10 = arith.extui %9 : i1 to i32
    %c0_i32_9 = arith.constant 0 : i32
    %11 = arith.cmpi ne, %10, %c0_i32_9 : i32
    scf.if %11 {
      %c0_10 = arith.constant 0 : index
      %c0_11 = arith.constant 0 : index
      %12 = vector.load %arg7[%c0_10, %c0_11] : memref<16x32xf32, #tpu.memory_space<vmem>>, vector<16x32xf32>
      %c0_12 = arith.constant 0 : index
      %c0_13 = arith.constant 0 : index
      %13 = vector.load %arg5[%c0_12, %c0_13] : memref<16x32xf32, #tpu.memory_space<vmem>>, vector<16x32xf32>
      %14 = arith.addf %12, %13 : vector<16x32xf32>
      %c0_14 = arith.constant 0 : index
      %c0_15 = arith.constant 0 : index
      %15 = vector.load %arg6[%c0_14, %c0_15] : memref<16x32xf32, #tpu.memory_space<vmem>>, vector<16x32xf32>
      tpu.vector_store %arg6[%c0_14, %c0_15], %14 {strides = array<i32>} : memref<16x32xf32, #tpu.memory_space<vmem>>, vector<16x32xf32>,
    } else {
    }
    return
  }
  func.func @transform_0(%arg0: i32, %arg1: i32, %arg2: i32) -> (i32, i32) {
    %c0_i32 = arith.constant 0 : i32
    return %arg0, %arg2 : i32, i32
  }
  func.func @transform_1(%arg0: i32, %arg1: i32, %arg2: i32) -> (i32, i32) {
    %c0_i32 = arith.constant 0 : i32
    return %arg2, %arg1 : i32, i32
  }
  func.func @transform_2(%arg0: i32, %arg1: i32, %arg2: i32) -> (i32, i32) {
    %c0_i32 = arith.constant 0 : i32
    return %arg0, %arg1 : i32, i32
  }
  func.func @transform_3(%arg0: i32, %arg1: i32, %arg2: i32) -> (i32, i32) {
    %c0_i32 = arith.constant 0 : i32
    return %arg0, %arg1 : i32, i32
  }
}

</mosaic_0001>

<llo_original>
// kernel: decoder_layer.7
$region0: #{decoder_layer.7}
  #allocation0 [shape = 'u32[]', space=smem, size = 0x4, offset = 0x4, fixed_abs, tag = 'smem constant byte address 0x4 - core index']
  #allocation1 [shape = 'u32[144,128]{1,0:T(1,128)}', space=vmem, size = 0x12000, scoped, tag = 'internal scratch']
  %s0 = inlined_call_operand.hbm [shape: f32[16,32], index: 0, kind: input, shape index: {}]
  %s1 = inlined_call_operand.hbm [shape: f32[16,1], index: 1, kind: output, shape index: {}]
  %s2 = sld [smem:[#allocation0]]
  $region18: #{decoder_layer.7} parent=0
    _
  %s4 = ssub.s32 1, %s2
  %s5 = scalar_select 0, %s4, %s2
  $region1: #{decoder_layer.7} parent=0
    #allocation2 [shape = 'u8[8192]{0}', space=vmem, size = 0x2000, scoped, tag = 'input window, operand 0, single buffered']
    #allocation3 [shape = 's32[1]{0}', space=sflag, size = 0x4, scoped, tag = 'scoped memory for decoder_layer.7']
    #allocation4 [shape = 's32[1]{0}', space=sflag, size = 0x4, scoped, tag = 'scoped memory for decoder_layer.7']
    #allocation5 [shape = 'u8[8192]{0}', space=vmem, size = 0x2000, scoped, tag = 'output window, operand 0, single buffered']
    %6 = vsyncpa [#allocation3], 0
    %7 = vsyncpa [#allocation4], 0
    // Predicated region
    $region2: #{decoder_layer.7} parent=1 // pred_check
      _
    $region3: #{decoder_layer.7} parent=1 // pred_check_branch
      %9 = sbr.rel (0) target = $region5
    $region4: #{decoder_layer.7} parent=1 // pred_region
      %s11 = ssub.s32 256, 256
      %12 = vsyncadd [#allocation3], %s11
      %s13 = sshll.u32 [#allocation2], 4
      %s14 = int_to_ptr.vmem [resolvable:$true] %s13
      %19 = dma.hbm_to_vmem [thread:$0]  %s0, 256, %s14, [#allocation3], 128, 128, 8
    $region5: #{decoder_layer.7} parent=1 // pred_fallthru
      _
    // Predicated region
    $region6: #{decoder_layer.7} parent=1 // pred_check
      _
    $region7: #{decoder_layer.7} parent=1 // pred_check_branch
      %21 = sbr.rel (0) target = $region9
    $region8: #{decoder_layer.7} parent=1 // pred_region
      %22 = dma.done [#allocation3], 256
    $region9: #{decoder_layer.7} parent=1 // pred_fallthru
      _
    %v23 = vld [vmem:[#allocation2] sm:$0xff]
    %v24 = vld [vmem:[#allocation2 + $0x8] sm:$0xff]
    %v25 = vmul.f32 %v23, %v23
    %v26 = vmul.f32 %v24, %v24
    %vm27 = vcmask 261120
    %v28 = vsel %vm27, %v25, 0.0
    %29 = vadd.xlane.f32.xlu0 %v28
    %v30 = vpop.xlane.xlu0 %29
    %v31 = vsel %vm27, %v26, 0.0
    %32 = vadd.xlane.f32.xlu0 %v31
    %v33 = vpop.xlane.xlu0 %32
    %v34 = vrcp.pop 32.0
    %v35 = vmul.f32 %v30, %v34
    %v36 = vmul.f32 %v33, %v34
    %v37 = vadd.f32 %v35, 1e-05
    %v38 = vadd.f32 %v36, 1e-05
    %v39 = vrsqrt.pop %v37
    %v40 = vrsqrt.pop %v38
    %vm41 = vcmask 7168
    %42 = vst.msk [vmem:[#allocation5] sm:$0xff] %vm41, %v39
    %43 = vst.msk [vmem:[#allocation5 + $0x8] sm:$0xff] %vm41, %v40
    // Predicated region
    $region10: #{decoder_layer.7} parent=1 // pred_check
      _
    $region11: #{decoder_layer.7} parent=1 // pred_check_branch
      %45 = sbr.rel (0) target = $region13
    $region12: #{decoder_layer.7} parent=1 // pred_region
      %s47 = ssub.s32 256, 256
      %48 = vsyncadd [#allocation4], %s47
      %s49 = sshll.u32 [#allocation5], 4
      %s50 = int_to_ptr.vmem [resolvable:$true] %s49
      %55 = dma.vmem_to_hbm [thread:$0]  %s50, 256, %s1, [#allocation4], 128, 128, 8
    $region13: #{decoder_layer.7} parent=1 // pred_fallthru
      _
    // Predicated region
    $region14: #{decoder_layer.7} parent=1 // pred_check
      _
    $region15: #{decoder_layer.7} parent=1 // pred_check_branch
      %57 = sbr.rel (0) target = $region17
    $region16: #{decoder_layer.7} parent=1 // pred_region
      %58 = dma.done [#allocation4], 256
    $region17: #{decoder_layer.7} parent=1 // pred_fallthru
      _
    %59 = vsyncpa [#allocation3], 1
    %60 = vsyncpa [#allocation4], 1

// kernel: decoder_layer.8
$region0: #{decoder_layer.8}
  #allocation0 [shape = 'u32[]', space=smem, size = 0x4, offset = 0x4, fixed_abs, tag = 'smem constant byte address 0x4 - core index']
  #allocation1 [shape = 'u32[144,128]{1,0:T(1,128)}', space=vmem, size = 0x12000, scoped, tag = 'internal scratch']
  #allocation2 [shape = 'f32[16,96]{1,0:T(8,128)}', space=vmem, size = 0x2000, scoped, tag = 'scratch operand']
  %s0 = inlined_call_operand.hbm [shape: f32[16,32], index: 0, kind: input, shape index: {}]
  %s1 = inlined_call_operand.hbm [shape: f32[16,1], index: 1, kind: input, shape index: {}]
  %s2 = inlined_call_operand.hbm [shape: f32[1,32], index: 2, kind: input, shape index: {}]
  %s3 = inlined_call_operand.hbm [shape: f32[32,96], index: 3, kind: input, shape index: {}]
  %s4 = inlined_call_operand.hbm [shape: f32[16,96], index: 4, kind: output, shape index: {}]
  %s5 = sld [smem:[#allocation0]]
  $region50: #{decoder_layer.8} parent=0
    _
  %s7 = ssub.s32 1, %s5
  %s8 = scalar_select 0, %s7, %s5
  $region1: #{decoder_layer.8} parent=0
    #allocation3 [shape = 'u8[8192]{0}', space=vmem, size = 0x2000, scoped, tag = 'input window, operand 0, single buffered']
    #allocation4 [shape = 's32[1]{0}', space=sflag, size = 0x4, scoped, tag = 'scoped memory for decoder_layer.8']
    #allocation5 [shape = 's32[1]{0}', space=sflag, size = 0x4, scoped, tag = 'scoped memory for decoder_layer.8']
    #allocation6 [shape = 'u8[8192]{0}', space=vmem, size = 0x2000, scoped, tag = 'input window, operand 1, single buffered']
    #allocation7 [shape = 's32[1]{0}', space=sflag, size = 0x4, scoped, tag = 'scoped memory for decoder_layer.8']
    #allocation8 [shape = 'u8[512]{0}', space=vmem, size = 0x400, scoped, tag = 'input window, operand 2, single buffered']
    #allocation9 [shape = 'u8[16384]{0}', space=vmem, size = 0x4000, scoped, tag = 'input window, operand 3, single buffered']
    #allocation10 [shape = 's32[1]{0}', space=sflag, size = 0x4, scoped, tag = 'scoped memory for decoder_layer.8']
    #allocation11 [shape = 'u8[8192]{0}', space=vmem, size = 0x2000, scoped, tag = 'output window, operand 0, single buffered']
    %9 = vsyncpa [#allocation4], 0
    %10 = vsyncpa [#allocation7], 0
    %11 = vsyncpa [#allocation10], 0
    %12 = vsyncpa [#allocation5], 0
    // Predicated region
    $region2: #{decoder_layer.8} parent=1 // pred_check
      _
    $region3: #{decoder_layer.8} parent=1 // pred_check_branch
      %14 = sbr.rel (0) target = $region5
    $region4: #{decoder_layer.8} parent=1 // pred_region
      %s16 = ssub.s32 256, 256
      %17 = vsyncadd [#allocation4], %s16
      %s18 = sshll.u32 [#allocation3], 4
      %s19 = int_to_ptr.vmem [resolvable:$true] %s18
      %24 = dma.hbm_to_vmem [thread:$0]  %s0, 256, %s19, [#allocation4], 128, 128, 8
    $region5: #{decoder_layer.8} parent=1 // pred_fallthru
      _
    // Predicated region
    $region6: #{decoder_layer.8} parent=1 // pred_check
      _
    $region7: #{decoder_layer.8} parent=1 // pred_check_branch
      %26 = sbr.rel (0) target = $region9
    $region8: #{decoder_layer.8} parent=1 // pred_region
      %s28 = ssub.s32 256, 256
      %29 = vsyncadd [#allocation7], %s28
      %s30 = sshll.u32 [#allocation6], 4
      %s31 = int_to_ptr.vmem [resolvable:$true] %s30
      %36 = dma.hbm_to_vmem [thread:$0]  %s1, 256, %s31, [#allocation7], 128, 128, 8
    $region9: #{decoder_layer.8} parent=1 // pred_fallthru
      _
    // Predicated region
    $region10: #{decoder_layer.8} parent=1 // pred_check
      _
    $region11: #{decoder_layer.8} parent=1 // pred_check_branch
      %38 = sbr.rel (0) target = $region13
    $region12: #{decoder_layer.8} parent=1 // pred_region
      %s40 = ssub.s32 16, 16
      %41 = vsyncadd [#allocation7], %s40
      %s43 = sshll.u32 [#allocation8], 4
      %s44 = int_to_ptr.vmem [resolvable:$true] %s43
      %46 = dma.hbm_to_vmem [thread:$0]  %s2, 16, %s44, [#allocation7]
    $region13: #{decoder_layer.8} parent=1 // pred_fallthru
      _
    // Predicated region
    $region14: #{decoder_layer.8} parent=1 // pred_check
      _
    $region15: #{decoder_layer.8} parent=1 // pred_check_branch
      %48 = sbr.rel (0) target = $region17
    $region16: #{decoder_layer.8} parent=1 // pred_region
      %s50 = ssub.s32 512, 512
      %51 = vsyncadd [#allocation10], %s50
      %s52 = sshll.u32 [#allocation9], 4
      %s53 = int_to_ptr.vmem [resolvable:$true] %s52
      %58 = dma.hbm_to_vmem [thread:$0]  %s3, 512, %s53, [#allocation10], 128, 128, 8
    $region17: #{decoder_layer.8} parent=1 // pred_fallthru
      _
    // Predicated region
    $region18: #{decoder_layer.8} parent=1 // pred_check
      _
    $region19: #{decoder_layer.8} parent=1 // pred_check_branch
      %60 = sbr.rel (0) target = $region21
    $region20: #{decoder_layer.8} parent=1 // pred_region
      %61 = dma.done [#allocation4], 256
    $region21: #{decoder_layer.8} parent=1 // pred_fallthru
      _
    // Predicated region
    $region22: #{decoder_layer.8} parent=1 // pred_check
      _
    $region23: #{decoder_layer.8} parent=1 // pred_check_branch
      %63 = sbr.rel (0) target = $region25
    $region24: #{decoder_layer.8} parent=1 // pred_region
      %64 = dma.done [#allocation7], 256
    $region25: #{decoder_layer.8} parent=1 // pred_fallthru
      _
    // Predicated region
    $region26: #{decoder_layer.8} parent=1 // pred_check
      _
    $region27: #{decoder_layer.8} parent=1 // pred_check_branch
      %66 = sbr.rel (0) target = $region29
    $region28: #{decoder_layer.8} parent=1 // pred_region
      %67 = dma.done [#allocation7], 16
    $region29: #{decoder_layer.8} parent=1 // pred_fallthru
      _
    // Predicated region
    $region30: #{decoder_layer.8} parent=1 // pred_check
      _
    $region31: #{decoder_layer.8} parent=1 // pred_check_branch
      %69 = sbr.rel (0) target = $region33
    $region32: #{decoder_layer.8} parent=1 // pred_region
      %70 = dma.done [#allocation10], 512
    $region33: #{decoder_layer.8} parent=1 // pred_fallthru
      _
    %p71 = scmp.eq.s32.totalorder 0, 0
    // Predicated region
    $region34: #{decoder_layer.8} parent=1 // pred_check
      %p72 = pneg %p71
    $region35: #{decoder_layer.8} parent=1 // pred_check_branch
      %74 = sbr.rel (%p72) target = $region37
    $region36: #{decoder_layer.8} parent=1 // pred_region
      %vm75 = vcmask 785408
      %76 = vst.msk [vmem:[#allocation2] sm:$0xff] %vm75, 0.0
      %77 = vst.msk [vmem:[#allocation2 + $0x8] sm:$0xff] %vm75, 0.0
    $region37: #{decoder_layer.8} parent=1 // pred_fallthru
      _
    %v78 = vld [vmem:[#allocation3] sm:$0xff]
    %v79 = vld [vmem:[#allocation3 + $0x8] sm:$0xff]
    %v80 = vld [vmem:[#allocation6] sm:$0xff]
    %v81 = vld [vmem:[#allocation6 + $0x8] sm:$0xff]
    %83 = vset.pattern.permute.xlu0 0
    %84 = vperm.xlu0 %83, %v80
    %v85 = vpop.permute.xlu0 %84
    %88 = vset.pattern.permute.xlu0 0
    %89 = vperm.xlu0 %88, %v81
    %v90 = vpop.permute.xlu0 %89
    %v92 = vmul.f32 %v78, %v85
    %v93 = vmul.f32 %v79, %v90
    %v94 = vld [vmem:[#allocation8] sm:$0x1]
    %v96 = vlaneseq
    %v97 = vshrl.u32 %v96, 7
    %v98 = vsub.s32 0, %v97
    %v99 = vrot.slane %v94, %v98
    %v101 = vmul.f32 %v92, %v99
    %v102 = vmul.f32 %v93, %v99
    %v103 = vld [vmem:[#allocation2] sm:$0xff]
    %v104 = vld [vmem:[#allocation2 + $0x8] sm:$0xff]
    %v105 = vld [vmem:[#allocation9] sm:$0xff]
    %v106 = vld [vmem:[#allocation9 + $0x8] sm:$0xff]
    %v107 = vld [vmem:[#allocation9 + $0x10] sm:$0xff]
    %v108 = vld [vmem:[#allocation9 + $0x18] sm:$0xff]
    %vm109 = vcmask 261120
    %v111 = vsel %vm109, %v101, 0
    %v114 = vsel %vm109, %v102, 0
    %116 = vmatprep.subr.mxu0 0.0
    %117 = vmatpush1.msra.mxu0 %v105
    %118 = vmatprep.subr.mxu0 0.0
    %119 = vmatpush1.msra.mxu0 %v106
    %120 = vmatprep.subr.mxu0 0.0
    %121 = vmatpush1.msra.mxu0 %v107
    %122 = vmatprep.subr.mxu0 0.0
    %123 = vmatpush1.msra.mxu0 %v108
    %124 = vmatprep.subr.mxu0 0.0
    %125 = vmatpush1.msra.mxu0 0.0
    %126 = vmatprep.subr.mxu0 0.0
    %127 = vmatpush1.msra.mxu0 0.0
    %128 = vmatprep.subr.mxu0 0.0
    %129 = vmatpush1.msra.mxu0 0.0
    %130 = vmatprep.subr.mxu0 0.0
    %131 = vmatpush1.msra.mxu0 0.0
    %132 = vmatprep.subr.mxu0 0.0
    %133 = vmatpush1.msra.mxu0 0.0
    %134 = vmatprep.subr.mxu0 0.0
    %135 = vmatpush1.msra.mxu0 0.0
    %136 = vmatprep.subr.mxu0 0.0
    %137 = vmatpush1.msra.mxu0 0.0
    %138 = vmatprep.subr.mxu0 0.0
    %139 = vmatpush1.msra.mxu0 0.0
    %140 = vmatprep.subr.mxu0 0.0
    %141 = vmatpush1.msra.mxu0 0.0
    %142 = vmatprep.subr.mxu0 0.0
    %143 = vmatpush1.msra.mxu0 0.0
    %144 = vmatprep.subr.mxu0 0.0
    %145 = vmatpush1.msra.mxu0 0.0
    %146 = vmatprep.subr.mxu0 0.0
    %147 = vmatpush1.msra.mxu0 0.0
    %148 = vmatprep.subr.mxu0 0.0
    %149 = vmatpush1.msra.mxu0 0.0
    %150 = vmatprep.subr.mxu0 0.0
    %151 = vmatpush1.msra.mxu0 0.0
    %152 = vmatprep.subr.mxu0 0.0
    %153 = vmatpush1.msra.mxu0 0.0
    %154 = vmatprep.subr.mxu0 0.0
    %155 = vmatpush1.msra.mxu0 0.0
    %156 = vmatprep.subr.mxu0 0.0
    %157 = vmatpush1.msra.mxu0 0.0
    %158 = vmatprep.subr.mxu0 0.0
    %159 = vmatpush1.msra.mxu0 0.0
    %160 = vmatprep.subr.mxu0 0.0
    %161 = vmatpush1.msra.mxu0 0.0
    %162 = vmatprep.subr.mxu0 0.0
    %163 = vmatpush1.msra.mxu0 0.0
    %164 = vmatprep.subr.mxu0 0.0
    %165 = vmatpush1.msra.mxu0 0.0
    %166 = vmatprep.subr.mxu0 0.0
    %167 = vmatpush1.msra.mxu0 0.0
    %168 = vmatprep.subr.mxu0 0.0
    %169 = vmatpush1.msra.mxu0 0.0
    %170 = vmatprep.subr.mxu0 0.0
    %171 = vmatpush1.msra.mxu0 0.0
    %172 = vmatprep.subr.mxu0 0.0
    %173 = vmatpush1.msra.mxu0 0.0
    %174 = vmatprep.subr.mxu0 0.0
    %175 = vmatpush1.msra.mxu0 0.0
    %176 = vmatprep.subr.mxu0 0.0
    %177 = vmatpush1.msra.mxu0 0.0
    %178 = vmatprep.subr.mxu0 0.0
    %179 = vmatpush1.msra.mxu0 0.0
    %180 = vmatprep.mubr.f32.mxu0 0.0
    %181 = vmatmul.mubr.f32.gmra.mrb[0].mxu0 %v111
    %v182 = vpop.f32.mrb[0].mxu0
    %v183 = vadd.f32 0.0, %v182
    %v184 = vpop.f32.mrb[0].mxu0
    %185 = vmatprep.mubr.f32.mxu0 0.0
    %186 = vmatmul.mubr.f32.gmra.mrb[0].mxu0 %v114
    %v187 = vpop.f32.mrb[0].mxu0
    %v188 = vadd.f32 0.0, %v187
    %v189 = vpop.f32.mrb[0].mxu0
    %190 = vdwg.mxu0
    %v191 = vadd.f32 %v103, %v183
    %v192 = vadd.f32 %v104, %v188
    %vm193 = vcmask 785408
    %194 = vst.msk [vmem:[#allocation2] sm:$0xff] %vm193, %v191
    %195 = vst.msk [vmem:[#allocation2 + $0x8] sm:$0xff] %vm193, %v192
    // Predicated region
    $region38: #{decoder_layer.8} parent=1 // pred_check
      %p196 = pneg %p71
    $region39: #{decoder_layer.8} parent=1 // pred_check_branch
      %198 = sbr.rel (%p196) target = $region41
    $region40: #{decoder_layer.8} parent=1 // pred_region
      %v199 = vld [vmem:[#allocation2] sm:$0xff]
      %v200 = vld [vmem:[#allocation2 + $0x8] sm:$0xff]
      %201 = vst.msk [vmem:[#allocation11] sm:$0xff] %vm193, %v199
      %202 = vst.msk [vmem:[#allocation11 + $0x8] sm:$0xff] %vm193, %v200
    $region41: #{decoder_layer.8} parent=1 // pred_fallthru
      _
    // Predicated region
    $region42: #{decoder_layer.8} parent=1 // pred_check
      _
    $region43: #{decoder_layer.8} parent=1 // pred_check_branch
      %204 = sbr.rel (0) target = $region45
    $region44: #{decoder_layer.8} parent=1 // pred_region
      %s206 = ssub.s32 256, 256
      %207 = vsyncadd [#allocation5], %s206
      %s208 = sshll.u32 [#allocation11], 4
      %s209 = int_to_ptr.vmem [resolvable:$true] %s208
      %214 = dma.vmem_to_hbm [thread:$0]  %s209, 256, %s4, [#allocation5], 128, 128, 8
    $region45: #{decoder_layer.8} parent=1 // pred_fallthru
      _
    // Predicated region
    $region46: #{decoder_layer.8} parent=1 // pred_check
      _
    $region47: #{decoder_layer.8} parent=1 // pred_check_branch
      %216 = sbr.rel (0) target = $region49
    $region48: #{decoder_layer.8} parent=1 // pred_region
      %217 = dma.done [#allocation5], 256
    $region49: #{decoder_layer.8} parent=1 // pred_fallthru
      _
    %218 = vsyncpa [#allocation4], 1
    %219 = vsyncpa [#allocation7], 1
    %220 = vsyncpa [#allocation10], 1
    %221 = vsyncpa [#allocation5], 1

// kernel: decoder_layer.9
$region0: #{decoder_layer.9}
  #allocation0 [shape = 'u32[]', space=smem, size = 0x4, offset = 0x4, fixed_abs, tag = 'smem constant byte address 0x4 - core index']
  #allocation1 [shape = 'u32[144,128]{1,0:T(1,128)}', space=vmem, size = 0x12000, scoped, tag = 'internal scratch']
  #allocation2 [shape = 'f32[8,1]{1,0:T(8,128)}', space=vmem, size = 0x1000, scoped, tag = 'scratch operand']
  #allocation3 [shape = 'f32[8,1]{1,0:T(8,128)}', space=vmem, size = 0x1000, scoped, tag = 'scratch operand']
  #allocation4 [shape = 'f32[8,16]{1,0:T(8,128)}', space=vmem, size = 0x1000, scoped, tag = 'scratch operand']
  %s0 = inlined_call_operand.hbm [shape: f32[2,2,8,16], index: 0, kind: input, shape index: {}]
  %s1 = inlined_call_operand.hbm [shape: f32[2,2,8,16], index: 1, kind: input, shape index: {}]
  %s2 = inlined_call_operand.hbm [shape: f32[2,2,8,16], index: 2, kind: input, shape index: {}]
  %s3 = inlined_call_operand.hbm [shape: f32[2,1,8,8], index: 3, kind: input, shape index: {}]
  %s4 = inlined_call_operand.hbm [shape: f32[2,8,16], index: 4, kind: input, shape index: {}, may-alias: {4,6}]
  %s5 = inlined_call_operand.hbm [shape: f32[2,8,16], index: 5, kind: input, shape index: {}, may-alias: {5,7}]
  %s6 = inlined_call_operand.hbm [shape: f32[2,8,16], index: 6, kind: input, shape index: {}, may-alias: {4,6}]
  %s7 = inlined_call_operand.hbm [shape: f32[2,8,16], index: 7, kind: input, shape index: {}, may-alias: {5,7}]
  %s8 = inlined_call_operand.hbm [shape: f32[2,2,8,16], index: 8, kind: output, shape index: {}]
  %s9 = sld [smem:[#allocation0]]
  $region105: #{decoder_layer.9} parent=0
    _
  %s11 = ssub.s32 1, %s9
  %s12 = scalar_select 0, %s11, %s9
  $region1: #{decoder_layer.9} parent=0
    #allocation5 [shape = 'u8[8192]{0}', space=vmem, size = 0x2000, scoped, tag = 'input window, operand 0']
    #allocation6 [shape = 's32[2]{0}', space=sflag, size = 0x8, scoped, tag = 'scoped memory for decoder_layer.9']
    #allocation7 [shape = 's32[2]{0}', space=sflag, size = 0x8, scoped, tag = 'scoped memory for decoder_layer.9']
    #allocation8 [shape = 'u8[8192]{0}', space=vmem, size = 0x2000, scoped, tag = 'input window, operand 1']
    #allocation9 [shape = 's32[2]{0}', space=sflag, size = 0x8, scoped, tag = 'scoped memory for decoder_layer.9']
    #allocation10 [shape = 'u8[8192]{0}', space=vmem, size = 0x2000, scoped, tag = 'input window, operand 2']
    #allocation11 [shape = 'u8[8192]{0}', space=vmem, size = 0x2000, scoped, tag = 'input window, operand 3']
    #allocation12 [shape = 's32[2]{0}', space=sflag, size = 0x8, scoped, tag = 'scoped memory for decoder_layer.9']
    #allocation13 [shape = 'u8[8192]{0}', space=vmem, size = 0x2000, scoped, tag = 'input window, operand 4']
    #allocation14 [shape = 'u8[8192]{0}', space=vmem, size = 0x2000, scoped, tag = 'input window, operand 5']
    #allocation15 [shape = 's32[2]{0}', space=sflag, size = 0x8, scoped, tag = 'scoped memory for decoder_layer.9']
    #allocation16 [shape = 'u8[8192]{0}', space=vmem, size = 0x2000, scoped, tag = 'input window, operand 6']
    #allocation17 [shape = 'u8[8192]{0}', space=vmem, size = 0x2000, scoped, tag = 'input window, operand 7']
    #allocation18 [shape = 's32[2]{0}', space=sflag, size = 0x8, scoped, tag = 'scoped memory for decoder_layer.9']
    #allocation19 [shape = 'u8[8192]{0}', space=vmem, size = 0x2000, scoped, tag = 'output window, operand 0']
    %13 = vsyncpa [#allocation6], 0
    %s14 = scalar_lea.sflag [#allocation6], 1
    %15 = vsyncpa %s14, 0
    %16 = vsyncpa [#allocation9], 0
    %s17 = scalar_lea.sflag [#allocation9], 1
    %18 = vsyncpa %s17, 0
    %19 = vsyncpa [#allocation12], 0
    %s20 = scalar_lea.sflag [#allocation12], 1
    %21 = vsyncpa %s20, 0
    %22 = vsyncpa [#allocation15], 0
    %s23 = scalar_lea.sflag [#allocation15], 1
    %24 = vsyncpa %s23, 0
    %25 = vsyncpa [#allocation18], 0
    %s26 = scalar_lea.sflag [#allocation18], 1
    %27 = vsyncpa %s26, 0
    %28 = vsyncpa [#allocation7], 0
    %s29 = scalar_lea.sflag [#allocation7], 1
    %30 = vsyncpa %s29, 0
    loop: start=0, step=1, limit=6
    $region2: #{decoder_layer.9} parent=1 // loop_pre_header
      _
    $region3: #{decoder_layer.9} parent=1 // loop_header
      %s32 = sphi 0, %s36
      %p33 = scmp.ge.s32.totalorder %s32, 6
      %s39 = sphi 0, %s65
      %s40 = sphi 0, %s61
      %s41 = sphi 0, %s57
      %s42 = sphi 0, %s53
      %s43 = sphi 0, %s39
      %s44 = sphi 0, %s40
      %s45 = sphi 0, %s41
      %s46 = sphi 0, %s42
      %s47 = sphi 0, %s43
      %s48 = sphi 0, %s44
      %s49 = sphi 0, %s45
      %s50 = sphi 0, %s46
      %s72 = sphi 0, %s74
      %s75 = sphi 0, %s72
      %s76 = sphi 0, %s75
      %s92 = sphi 0, %s76
      %s102 = sphi 0, %s104
      %s105 = sphi 0, %s102
      %s106 = sphi 0, %s105
      %s122 = sphi 0, %s106
      %s132 = sphi 0, %s134
      %s135 = sphi 0, %s132
      %s136 = sphi 0, %s135
      %s152 = sphi 0, %s136
      %s162 = sphi 0, %s164
      %s165 = sphi 0, %s162
      %s166 = sphi 0, %s165
      %s182 = sphi 0, %s166
      %s190 = sphi 0, %s192
      %s193 = sphi 0, %s190
      %s194 = sphi 0, %s193
      %s210 = sphi 0, %s194
      %s218 = sphi 0, %s220
      %s221 = sphi 0, %s218
      %s222 = sphi 0, %s221
      %s238 = sphi 0, %s222
      %s246 = sphi 0, %s248
      %s249 = sphi 0, %s246
      %s250 = sphi 0, %s249
      %s266 = sphi 0, %s250
      %s274 = sphi 0, %s276
      %s277 = sphi 0, %s274
      %s278 = sphi 0, %s277
      %s294 = sphi 0, %s278
      %s304 = sphi 0, %s306
      %s307 = sphi 0, %s304
      %s308 = sphi 0, %s307
      %s324 = sphi 0, %s308
    $region4: #{decoder_layer.9} parent=1 // loop_header_branch
      %35 = sbr.rel (%p33) target = $region8
    $region5: #{decoder_layer.9} parent=1 // loop_body
      %s37 = ssub.s32 %s32, 1
      %s38 = ssub.s32 %s32, 2
      %s51 = sadd.s32 1, %s42
      %p52 = scmp.ge.s32.totalorder %s51, 1
      %s53 = scalar_select %p52, 0, %s51
      %s54 = sadd.s32 1, %s41
      %s55 = scalar_select %p52, %s54, %s41
      %p56 = scmp.ge.s32.totalorder %s55, 1
      %s57 = scalar_select %p56, 0, %s55
      %s58 = sadd.s32 1, %s40
      %s59 = scalar_select %p56, %s58, %s40
      %p60 = scmp.ge.s32.totalorder %s59, 2
      %s61 = scalar_select %p60, 0, %s59
      %s62 = sadd.s32 1, %s39
      %s63 = scalar_select %p60, %s62, %s39
      %p64 = scmp.ge.s32.totalorder %s63, 2
      %s65 = scalar_select %p64, 0, %s63
      %s66 = ssub.s32 %s39, %s65
      %s67 = ssub.s32 %s40, %s61
      %s68 = sor.u32 %s66, %s67
      %s69 = ssub.s32 %s41, %s57
      %s70 = sor.u32 %s68, %s69
      %p71 = scmp.eq.s32.totalorder %s70, 0
      %s73 = sadd.s32 %s72, 1
      %s74 = scalar_select %p71, %s72, %s73
      %p77 = pneg %p71
      %p78 = scmp.eq.s32.totalorder %s32, 3
      %p79 = por %p77, %p78
      %p80 = scmp.ne.s32.totalorder %s72, %s75
      %p81 = scmp.eq.s32.totalorder %s32, 0
      %p82 = por %p80, %p81
      %p83 = scmp.ne.s32.totalorder %s72, %s75
      %p84 = scmp.eq.s32.totalorder %s37, 3
      %p85 = por %p83, %p84
      %p86 = scmp.ne.s32.totalorder %s75, %s76
      %p87 = scmp.eq.s32.totalorder %s37, 0
      %p88 = por %p86, %p87
      %p89 = scmp.ne.s32.totalorder %s75, %s76
      %p90 = scmp.eq.s32.totalorder %s38, 3
      %p91 = por %p89, %p90
      %p93 = scmp.ne.s32.totalorder %s76, %s92
      %p94 = scmp.eq.s32.totalorder %s38, 0
      %p95 = por %p93, %p94
      %s96 = ssub.s32 %s39, %s65
      %s97 = ssub.s32 %s40, %s61
      %s98 = sor.u32 %s96, %s97
      %s99 = ssub.s32 %s42, %s53
      %s100 = sor.u32 %s98, %s99
      %p101 = scmp.eq.s32.totalorder %s100, 0
      %s103 = sadd.s32 %s102, 1
      %s104 = scalar_select %p101, %s102, %s103
      %p107 = pneg %p101
      %p108 = scmp.eq.s32.totalorder %s32, 3
      %p109 = por %p107, %p108
      %p110 = scmp.ne.s32.totalorder %s102, %s105
      %p111 = scmp.eq.s32.totalorder %s32, 0
      %p112 = por %p110, %p111
      %p113 = scmp.ne.s32.totalorder %s102, %s105
      %p114 = scmp.eq.s32.totalorder %s37, 3
      %p115 = por %p113, %p114
      %p116 = scmp.ne.s32.totalorder %s105, %s106
      %p117 = scmp.eq.s32.totalorder %s37, 0
      %p118 = por %p116, %p117
      %p119 = scmp.ne.s32.totalorder %s105, %s106
      %p120 = scmp.eq.s32.totalorder %s38, 3
      %p121 = por %p119, %p120
      %p123 = scmp.ne.s32.totalorder %s106, %s122
      %p124 = scmp.eq.s32.totalorder %s38, 0
      %p125 = por %p123, %p124
      %s126 = ssub.s32 %s39, %s65
      %s127 = ssub.s32 %s40, %s61
      %s128 = sor.u32 %s126, %s127
      %s129 = ssub.s32 %s42, %s53
      %s130 = sor.u32 %s128, %s129
      %p131 = scmp.eq.s32.totalorder %s130, 0
      %s133 = sadd.s32 %s132, 1
      %s134 = scalar_select %p131, %s132, %s133
      %p137 = pneg %p131
      %p138 = scmp.eq.s32.totalorder %s32, 3
      %p139 = por %p137, %p138
      %p140 = scmp.ne.s32.totalorder %s132, %s135
      %p141 = scmp.eq.s32.totalorder %s32, 0
      %p142 = por %p140, %p141
      %p143 = scmp.ne.s32.totalorder %s132, %s135
      %p144 = scmp.eq.s32.totalorder %s37, 3
      %p145 = por %p143, %p144
      %p146 = scmp.ne.s32.totalorder %s135, %s136
      %p147 = scmp.eq.s32.totalorder %s37, 0
      %p148 = por %p146, %p147
      %p149 = scmp.ne.s32.totalorder %s135, %s136
      %p150 = scmp.eq.s32.totalorder %s38, 3
      %p151 = por %p149, %p150
      %p153 = scmp.ne.s32.totalorder %s136, %s152
      %p154 = scmp.eq.s32.totalorder %s38, 0
      %p155 = por %p153, %p154
      %s156 = ssub.s32 %s39, %s65
      %s157 = ssub.s32 %s41, %s57
      %s158 = sor.u32 %s156, %s157
      %s159 = ssub.s32 %s42, %s53
      %s160 = sor.u32 %s158, %s159
      %p161 = scmp.eq.s32.totalorder %s160, 0
      %s163 = sadd.s32 %s162, 1
      %s164 = scalar_select %p161, %s162, %s163
      %p167 = pneg %p161
      %p168 = scmp.eq.s32.totalorder %s32, 3
      %p169 = por %p167, %p168
      %p170 = scmp.ne.s32.totalorder %s162, %s165
      %p171 = scmp.eq.s32.totalorder %s32, 0
      %p172 = por %p170, %p171
      %p173 = scmp.ne.s32.totalorder %s162, %s165
      %p174 = scmp.eq.s32.totalorder %s37, 3
      %p175 = por %p173, %p174
      %p176 = scmp.ne.s32.totalorder %s165, %s166
      %p177 = scmp.eq.s32.totalorder %s37, 0
      %p178 = por %p176, %p177
      %p179 = scmp.ne.s32.totalorder %s165, %s166
      %p180 = scmp.eq.s32.totalorder %s38, 3
      %p181 = por %p179, %p180
      %p183 = scmp.ne.s32.totalorder %s166, %s182
      %p184 = scmp.eq.s32.totalorder %s38, 0
      %p185 = por %p183, %p184
      %s186 = ssub.s32 %s39, %s65
      %s187 = ssub.s32 %s41, %s57
      %s188 = sor.u32 %s186, %s187
      %p189 = scmp.eq.s32.totalorder %s188, 0
      %s191 = sadd.s32 %s190, 1
      %s192 = scalar_select %p189, %s190, %s191
      %p195 = pneg %p189
      %p196 = scmp.eq.s32.totalorder %s32, 3
      %p197 = por %p195, %p196
      %p198 = scmp.ne.s32.totalorder %s190, %s193
      %p199 = scmp.eq.s32.totalorder %s32, 0
      %p200 = por %p198, %p199
      %p201 = scmp.ne.s32.totalorder %s190, %s193
      %p202 = scmp.eq.s32.totalorder %s37, 3
      %p203 = por %p201, %p202
      %p204 = scmp.ne.s32.totalorder %s193, %s194
      %p205 = scmp.eq.s32.totalorder %s37, 0
      %p206 = por %p204, %p205
      %p207 = scmp.ne.s32.totalorder %s193, %s194
      %p208 = scmp.eq.s32.totalorder %s38, 3
      %p209 = por %p207, %p208
      %p211 = scmp.ne.s32.totalorder %s194, %s210
      %p212 = scmp.eq.s32.totalorder %s38, 0
      %p213 = por %p211, %p212
      %s214 = ssub.s32 %s39, %s65
      %s215 = ssub.s32 %s41, %s57
      %s216 = sor.u32 %s214, %s215
      %p217 = scmp.eq.s32.totalorder %s216, 0
      %s219 = sadd.s32 %s218, 1
      %s220 = scalar_select %p217, %s218, %s219
      %p223 = pneg %p217
      %p224 = scmp.eq.s32.totalorder %s32, 3
      %p225 = por %p223, %p224
      %p226 = scmp.ne.s32.totalorder %s218, %s221
      %p227 = scmp.eq.s32.totalorder %s32, 0
      %p228 = por %p226, %p227
      %p229 = scmp.ne.s32.totalorder %s218, %s221
      %p230 = scmp.eq.s32.totalorder %s37, 3
      %p231 = por %p229, %p230
      %p232 = scmp.ne.s32.totalorder %s221, %s222
      %p233 = scmp.eq.s32.totalorder %s37, 0
      %p234 = por %p232, %p233
      %p235 = scmp.ne.s32.totalorder %s221, %s222
      %p236 = scmp.eq.s32.totalorder %s38, 3
      %p237 = por %p235, %p236
      %p239 = scmp.ne.s32.totalorder %s222, %s238
      %p240 = scmp.eq.s32.totalorder %s38, 0
      %p241 = por %p239, %p240
      %s242 = ssub.s32 %s39, %s65
      %s243 = ssub.s32 %s42, %s53
      %s244 = sor.u32 %s242, %s243
      %p245 = scmp.eq.s32.totalorder %s244, 0
      %s247 = sadd.s32 %s246, 1
      %s248 = scalar_select %p245, %s246, %s247
      %p251 = pneg %p245
      %p252 = scmp.eq.s32.totalorder %s32, 3
      %p253 = por %p251, %p252
      %p254 = scmp.ne.s32.totalorder %s246, %s249
      %p255 = scmp.eq.s32.totalorder %s32, 0
      %p256 = por %p254, %p255
      %p257 = scmp.ne.s32.totalorder %s246, %s249
      %p258 = scmp.eq.s32.totalorder %s37, 3
      %p259 = por %p257, %p258
      %p260 = scmp.ne.s32.totalorder %s249, %s250
      %p261 = scmp.eq.s32.totalorder %s37, 0
      %p262 = por %p260, %p261
      %p263 = scmp.ne.s32.totalorder %s249, %s250
      %p264 = scmp.eq.s32.totalorder %s38, 3
      %p265 = por %p263, %p264
      %p267 = scmp.ne.s32.totalorder %s250, %s266
      %p268 = scmp.eq.s32.totalorder %s38, 0
      %p269 = por %p267, %p268
      %s270 = ssub.s32 %s39, %s65
      %s271 = ssub.s32 %s42, %s53
      %s272 = sor.u32 %s270, %s271
      %p273 = scmp.eq.s32.totalorder %s272, 0
      %s275 = sadd.s32 %s274, 1
      %s276 = scalar_select %p273, %s274, %s275
      %p279 = pneg %p273
      %p280 = scmp.eq.s32.totalorder %s32, 3
      %p281 = por %p279, %p280
      %p282 = scmp.ne.s32.totalorder %s274, %s277
      %p283 = scmp.eq.s32.totalorder %s32, 0
      %p284 = por %p282, %p283
      %p285 = scmp.ne.s32.totalorder %s274, %s277
      %p286 = scmp.eq.s32.totalorder %s37, 3
      %p287 = por %p285, %p286
      %p288 = scmp.ne.s32.totalorder %s277, %s278
      %p289 = scmp.eq.s32.totalorder %s37, 0
      %p290 = por %p288, %p289
      %p291 = scmp.ne.s32.totalorder %s277, %s278
      %p292 = scmp.eq.s32.totalorder %s38, 3
      %p293 = por %p291, %p292
      %p295 = scmp.ne.s32.totalorder %s278, %s294
      %p296 = scmp.eq.s32.totalorder %s38, 0
      %p297 = por %p295, %p296
      %s298 = ssub.s32 %s39, %s65
      %s299 = ssub.s32 %s40, %s61
      %s300 = sor.u32 %s298, %s299
      %s301 = ssub.s32 %s41, %s57
      %s302 = sor.u32 %s300, %s301
      %p303 = scmp.eq.s32.totalorder %s302, 0
      %s305 = sadd.s32 %s304, 1
      %s306 = scalar_select %p303, %s304, %s305
      %p309 = pneg %p303
      %p310 = scmp.eq.s32.totalorder %s32, 3
      %p311 = por %p309, %p310
      %p312 = scmp.ne.s32.totalorder %s304, %s307
      %p313 = scmp.eq.s32.totalorder %s32, 0
      %p314 = por %p312, %p313
      %p315 = scmp.ne.s32.totalorder %s304, %s307
      %p316 = scmp.eq.s32.totalorder %s37, 3
      %p317 = por %p315, %p316
      %p318 = scmp.ne.s32.totalorder %s307, %s308
      %p319 = scmp.eq.s32.totalorder %s37, 0
      %p320 = por %p318, %p319
      %p321 = scmp.ne.s32.totalorder %s307, %s308
      %p322 = scmp.eq.s32.totalorder %s38, 3
      %p323 = por %p321, %p322
      %p325 = scmp.ne.s32.totalorder %s308, %s324
      %p326 = scmp.eq.s32.totalorder %s38, 0
      %p327 = por %p325, %p326
      %p328 = scmp.le.s32.totalorder 1, %s32
      %p329 = scmp.lt.s32.totalorder %s32, 5
      %p330 = pnand %p328, %p329
      %p331 = pneg %p330
      // Predicated region
      $region9: #{decoder_layer.9} parent=5 // pred_check
        _
      $region10: #{decoder_layer.9} parent=5 // pred_check_branch
        %333 = sbr.rel (%p330) target = $region12
      $region11: #{decoder_layer.9} parent=5 // pred_region
        %s334 = ssub.s32 %s32, 1
      $region12: #{decoder_layer.9} parent=5 // pred_fallthru
        _
      %p335 = scmp.lt.s32.totalorder %s32, 4
      // Predicated region
      $region13: #{decoder_layer.9} parent=5 // pred_check
        %p336 = pneg %p335
      $region14: #{decoder_layer.9} parent=5 // pred_check_branch
        %338 = sbr.rel (%p336) target = $region16
      $region15: #{decoder_layer.9} parent=5 // pred_region
        // Predicated region
        $region17: #{decoder_layer.9} parent=15 // pred_check
          %p339 = pneg %p82
        $region18: #{decoder_layer.9} parent=15 // pred_check_branch
          %341 = sbr.rel (%p339) target = $region20
        $region19: #{decoder_layer.9} parent=15 // pred_region
          %s342 = sand.u32 %s72, 1
          %s343 = scalar_lea.sflag [#allocation6], %s342
          %s344 = sand.u32 %s72, 1
          %s345 = smul.addr %s344, 8
          %s346 = scalar_lea.vmem [#allocation5], %s345
          %s348 = ssub.s32 128, 128
          %349 = vsyncadd %s343, %s348
          %s350 = sadd.s32 %s41, %s40
          %s351 = smul.addr %s39, 2
          %s352 = sadd.s32 %s350, %s351
          %s353 = smul.addr %s352, 128
          %s354 = scalar_lea.hbm %s0, %s353
          %s356 = sshll.u32 %s346, 4
          %s357 = int_to_ptr.vmem [resolvable:$true] %s356
          %359 = dma.hbm_to_vmem [thread:$0]  %s354, 128, %s357, %s343
        $region20: #{decoder_layer.9} parent=15 // pred_fallthru
          _
        // Predicated region
        $region21: #{decoder_layer.9} parent=15 // pred_check
          %p360 = pneg %p112
        $region22: #{decoder_layer.9} parent=15 // pred_check_branch
          %362 = sbr.rel (%p360) target = $region24
        $region23: #{decoder_layer.9} parent=15 // pred_region
          %s363 = sand.u32 %s32, 1
          %s364 = scalar_lea.sflag [#allocation9], %s363
          %s365 = sand.u32 %s102, 1
          %s366 = smul.addr %s365, 8
          %s367 = scalar_lea.vmem [#allocation8], %s366
          %s369 = ssub.s32 128, 128
          %370 = vsyncadd %s364, %s369
          %s371 = sadd.s32 %s42, %s40
          %s372 = smul.addr %s39, 2
          %s373 = sadd.s32 %s371, %s372
          %s374 = smul.addr %s373, 128
          %s375 = scalar_lea.hbm %s1, %s374
          %s377 = sshll.u32 %s367, 4
          %s378 = int_to_ptr.vmem [resolvable:$true] %s377
          %380 = dma.hbm_to_vmem [thread:$0]  %s375, 128, %s378, %s364
        $region24: #{decoder_layer.9} parent=15 // pred_fallthru
          _
        // Predicated region
        $region25: #{decoder_layer.9} parent=15 // pred_check
          %p381 = pneg %p142
        $region26: #{decoder_layer.9} parent=15 // pred_check_branch
          %383 = sbr.rel (%p381) target = $region28
        $region27: #{decoder_layer.9} parent=15 // pred_region
          %s384 = sand.u32 %s32, 1
          %s385 = scalar_lea.sflag [#allocation9], %s384
          %s386 = sand.u32 %s132, 1
          %s387 = smul.addr %s386, 8
          %s388 = scalar_lea.vmem [#allocation10], %s387
          %s390 = ssub.s32 128, 128
          %391 = vsyncadd %s385, %s390
          %s392 = sadd.s32 %s42, %s40
          %s393 = smul.addr %s39, 2
          %s394 = sadd.s32 %s392, %s393
          %s395 = smul.addr %s394, 128
          %s396 = scalar_lea.hbm %s2, %s395
          %s398 = sshll.u32 %s388, 4
          %s399 = int_to_ptr.vmem [resolvable:$true] %s398
          %401 = dma.hbm_to_vmem [thread:$0]  %s396, 128, %s399, %s385
        $region28: #{decoder_layer.9} parent=15 // pred_fallthru
          _
        // Predicated region
        $region29: #{decoder_layer.9} parent=15 // pred_check
          %p402 = pneg %p172
        $region30: #{decoder_layer.9} parent=15 // pred_check_branch
          %404 = sbr.rel (%p402) target = $region32
        $region31: #{decoder_layer.9} parent=15 // pred_region
          %s405 = sand.u32 %s32, 1
          %s406 = scalar_lea.sflag [#allocation12], %s405
          %s407 = sand.u32 %s162, 1
          %s408 = smul.addr %s407, 8
          %s409 = scalar_lea.vmem [#allocation11], %s408
          %s411 = ssub.s32 128, 128
          %412 = vsyncadd %s406, %s411
          %s413 = sadd.s32 %s42, %s41
          %s414 = sadd.s32 %s413, %s39
          %s415 = smul.addr %s414, 128
          %s416 = scalar_lea.hbm %s3, %s415
          %s418 = sshll.u32 %s409, 4
          %s419 = int_to_ptr.vmem [resolvable:$true] %s418
          %421 = dma.hbm_to_vmem [thread:$0]  %s416, 128, %s419, %s406
        $region32: #{decoder_layer.9} parent=15 // pred_fallthru
          _
        // Predicated region
        $region33: #{decoder_layer.9} parent=15 // pred_check
          %p422 = pneg %p200
        $region34: #{decoder_layer.9} parent=15 // pred_check_branch
          %424 = sbr.rel (%p422) target = $region36
        $region35: #{decoder_layer.9} parent=15 // pred_region
          %s425 = sand.u32 %s32, 1
          %s426 = scalar_lea.sflag [#allocation12], %s425
          %s427 = sand.u32 %s190, 1
          %s428 = smul.addr %s427, 8
          %s429 = scalar_lea.vmem [#allocation13], %s428
          %s431 = ssub.s32 128, 128
          %432 = vsyncadd %s426, %s431
          %s433 = sadd.s32 %s41, %s39
          %s434 = smul.addr %s433, 128
          %s435 = scalar_lea.hbm %s4, %s434
          %s437 = sshll.u32 %s429, 4
          %s438 = int_to_ptr.vmem [resolvable:$true] %s437
          %440 = dma.hbm_to_vmem [thread:$0]  %s435, 128, %s438, %s426
        $region36: #{decoder_layer.9} parent=15 // pred_fallthru
          _
        // Predicated region
        $region37: #{decoder_layer.9} parent=15 // pred_check
          %p441 = pneg %p228
        $region38: #{decoder_layer.9} parent=15 // pred_check_branch
          %443 = sbr.rel (%p441) target = $region40
        $region39: #{decoder_layer.9} parent=15 // pred_region
          %s444 = sand.u32 %s32, 1
          %s445 = scalar_lea.sflag [#allocation15], %s444
          %s446 = sand.u32 %s218, 1
          %s447 = smul.addr %s446, 8
          %s448 = scalar_lea.vmem [#allocation14], %s447
          %s450 = ssub.s32 128, 128
          %451 = vsyncadd %s445, %s450
          %s452 = sadd.s32 %s41, %s39
          %s453 = smul.addr %s452, 128
          %s454 = scalar_lea.hbm %s5, %s453
          %s456 = sshll.u32 %s448, 4
          %s457 = int_to_ptr.vmem [resolvable:$true] %s456
          %459 = dma.hbm_to_vmem [thread:$0]  %s454, 128, %s457, %s445
        $region40: #{decoder_layer.9} parent=15 // pred_fallthru
          _
        // Predicated region
        $region41: #{decoder_layer.9} parent=15 // pred_check
          %p460 = pneg %p256
        $region42: #{decoder_layer.9} parent=15 // pred_check_branch
          %462 = sbr.rel (%p460) target = $region44
        $region43: #{decoder_layer.9} parent=15 // pred_region
          %s463 = sand.u32 %s32, 1
          %s464 = scalar_lea.sflag [#allocation15], %s463
          %s465 = sand.u32 %s246, 1
          %s466 = smul.addr %s465, 8
          %s467 = scalar_lea.vmem [#allocation16], %s466
          %s469 = ssub.s32 128, 128
          %470 = vsyncadd %s464, %s469
          %s471 = sadd.s32 %s42, %s39
          %s472 = smul.addr %s471, 128
          %s473 = scalar_lea.hbm %s6, %s472
          %s475 = sshll.u32 %s467, 4
          %s476 = int_to_ptr.vmem [resolvable:$true] %s475
          %478 = dma.hbm_to_vmem [thread:$0]  %s473, 128, %s476, %s464
        $region44: #{decoder_layer.9} parent=15 // pred_fallthru
          _
        // Predicated region
        $region45: #{decoder_layer.9} parent=15 // pred_check
          %p479 = pneg %p284
        $region46: #{decoder_layer.9} parent=15 // pred_check_branch
          %481 = sbr.rel (%p479) target = $region48
        $region47: #{decoder_layer.9} parent=15 // pred_region
          %s482 = sand.u32 %s274, 1
          %s483 = scalar_lea.sflag [#allocation18], %s482
          %s484 = sand.u32 %s274, 1
          %s485 = smul.addr %s484, 8
          %s486 = scalar_lea.vmem [#allocation17], %s485
          %s488 = ssub.s32 128, 128
          %489 = vsyncadd %s483, %s488
          %s490 = sadd.s32 %s42, %s39
          %s491 = smul.addr %s490, 128
          %s492 = scalar_lea.hbm %s7, %s491
          %s494 = sshll.u32 %s486, 4
          %s495 = int_to_ptr.vmem [resolvable:$true] %s494
          %497 = dma.hbm_to_vmem [thread:$0]  %s492, 128, %s495, %s483
        $region48: #{decoder_layer.9} parent=15 // pred_fallthru
          _
      $region16: #{decoder_layer.9} parent=5 // pred_fallthru
        _
      %p498 = scmp.le.s32.totalorder 1, %s32
      %p499 = scmp.lt.s32.totalorder %s32, 5
      %p500 = pnand %p498, %p499
      %p501 = pneg %p500
      // Predicated region
      $region49: #{decoder_layer.9} parent=5 // pred_check
        _
      $region50: #{decoder_layer.9} parent=5 // pred_check_branch
        %503 = sbr.rel (%p500) target = $region52
      $region51: #{decoder_layer.9} parent=5 // pred_region
        %s504 = ssub.s32 %s32, 1
        %s505 = sand.u32 %s75, 1
        %s506 = scalar_lea.sflag [#allocation6], %s505
        %s507 = sand.u32 %s75, 1
        %s508 = smul.addr %s507, 8
        %s509 = scalar_lea.vmem [#allocation5], %s508
        // Predicated region
        $region53: #{decoder_layer.9} parent=51 // pred_check
          %p510 = pneg %p88
        $region54: #{decoder_layer.9} parent=51 // pred_check_branch
          %512 = sbr.rel (%p510) target = $region56
        $region55: #{decoder_layer.9} parent=51 // pred_region
          %513 = dma.done %s506, 128
        $region56: #{decoder_layer.9} parent=51 // pred_fallthru
          _
        %s514 = sand.u32 %s37, 1
        %s515 = scalar_lea.sflag [#allocation9], %s514
        %s516 = sand.u32 %s105, 1
        %s517 = smul.addr %s516, 8
        %s518 = scalar_lea.vmem [#allocation8], %s517
        // Predicated region
        $region57: #{decoder_layer.9} parent=51 // pred_check
          %p519 = pneg %p118
        $region58: #{decoder_layer.9} parent=51 // pred_check_branch
          %521 = sbr.rel (%p519) target = $region60
        $region59: #{decoder_layer.9} parent=51 // pred_region
          %522 = dma.done %s515, 128
        $region60: #{decoder_layer.9} parent=51 // pred_fallthru
          _
        %s523 = sand.u32 %s37, 1
        %s524 = scalar_lea.sflag [#allocation9], %s523
        %s525 = sand.u32 %s135, 1
        %s526 = smul.addr %s525, 8
        %s527 = scalar_lea.vmem [#allocation10], %s526
        // Predicated region
        $region61: #{decoder_layer.9} parent=51 // pred_check
          %p528 = pneg %p148
        $region62: #{decoder_layer.9} parent=51 // pred_check_branch
          %530 = sbr.rel (%p528) target = $region64
        $region63: #{decoder_layer.9} parent=51 // pred_region
          %531 = dma.done %s524, 128
        $region64: #{decoder_layer.9} parent=51 // pred_fallthru
          _
        %s532 = sand.u32 %s37, 1
        %s533 = scalar_lea.sflag [#allocation12], %s532
        %s534 = sand.u32 %s165, 1
        %s535 = smul.addr %s534, 8
        %s536 = scalar_lea.vmem [#allocation11], %s535
        // Predicated region
        $region65: #{decoder_layer.9} parent=51 // pred_check
          %p537 = pneg %p178
        $region66: #{decoder_layer.9} parent=51 // pred_check_branch
          %539 = sbr.rel (%p537) target = $region68
        $region67: #{decoder_layer.9} parent=51 // pred_region
          %540 = dma.done %s533, 128
        $region68: #{decoder_layer.9} parent=51 // pred_fallthru
          _
        %s541 = sand.u32 %s37, 1
        %s542 = scalar_lea.sflag [#allocation12], %s541
        %s543 = sand.u32 %s193, 1
        %s544 = smul.addr %s543, 8
        %s545 = scalar_lea.vmem [#allocation13], %s544
        // Predicated region
        $region69: #{decoder_layer.9} parent=51 // pred_check
          %p546 = pneg %p206
        $region70: #{decoder_layer.9} parent=51 // pred_check_branch
          %548 = sbr.rel (%p546) target = $region72
        $region71: #{decoder_layer.9} parent=51 // pred_region
          %549 = dma.done %s542, 128
        $region72: #{decoder_layer.9} parent=51 // pred_fallthru
          _
        %s550 = sand.u32 %s37, 1
        %s551 = scalar_lea.sflag [#allocation15], %s550
        %s552 = sand.u32 %s221, 1
        %s553 = smul.addr %s552, 8
        %s554 = scalar_lea.vmem [#allocation14], %s553
        // Predicated region
        $region73: #{decoder_layer.9} parent=51 // pred_check
          %p555 = pneg %p234
        $region74: #{decoder_layer.9} parent=51 // pred_check_branch
          %557 = sbr.rel (%p555) target = $region76
        $region75: #{decoder_layer.9} parent=51 // pred_region
          %558 = dma.done %s551, 128
        $region76: #{decoder_layer.9} parent=51 // pred_fallthru
          _
        %s559 = sand.u32 %s37, 1
        %s560 = scalar_lea.sflag [#allocation15], %s559
        %s561 = sand.u32 %s249, 1
        %s562 = smul.addr %s561, 8
        %s563 = scalar_lea.vmem [#allocation16], %s562
        // Predicated region
        $region77: #{decoder_layer.9} parent=51 // pred_check
          %p564 = pneg %p262
        $region78: #{decoder_layer.9} parent=51 // pred_check_branch
          %566 = sbr.rel (%p564) target = $region80
        $region79: #{decoder_layer.9} parent=51 // pred_region
          %567 = dma.done %s560, 128
        $region80: #{decoder_layer.9} parent=51 // pred_fallthru
          _
        %s568 = sand.u32 %s277, 1
        %s569 = scalar_lea.sflag [#allocation18], %s568
        %s570 = sand.u32 %s277, 1
        %s571 = smul.addr %s570, 8
        %s572 = scalar_lea.vmem [#allocation17], %s571
        // Predicated region
        $region81: #{decoder_layer.9} parent=51 // pred_check
          %p573 = pneg %p290
        $region82: #{decoder_layer.9} parent=51 // pred_check_branch
          %575 = sbr.rel (%p573) target = $region84
        $region83: #{decoder_layer.9} parent=51 // pred_region
          %576 = dma.done %s569, 128
        $region84: #{decoder_layer.9} parent=51 // pred_fallthru
          _
        %s577 = sand.u32 %s75, 1
        %s578 = scalar_lea.sflag [#allocation6], %s577
        %s579 = sand.u32 %s75, 1
        %s580 = smul.addr %s579, 8
        %s581 = scalar_lea.vmem [#allocation5], %s580
        %p582 = pneg %p88
        %p583 = pneg %p85
        %s584 = sand.u32 %s37, 1
        %s585 = scalar_lea.sflag [#allocation9], %s584
        %s586 = sand.u32 %s105, 1
        %s587 = smul.addr %s586, 8
        %s588 = scalar_lea.vmem [#allocation8], %s587
        %p589 = pneg %p118
        %p590 = pneg %p115
        %s591 = sand.u32 %s37, 1
        %s592 = scalar_lea.sflag [#allocation9], %s591
        %s593 = sand.u32 %s135, 1
        %s594 = smul.addr %s593, 8
        %s595 = scalar_lea.vmem [#allocation10], %s594
        %p596 = pneg %p148
        %p597 = pneg %p145
        %s598 = sand.u32 %s37, 1
        %s599 = scalar_lea.sflag [#allocation12], %s598
        %s600 = sand.u32 %s165, 1
        %s601 = smul.addr %s600, 8
        %s602 = scalar_lea.vmem [#allocation11], %s601
        %p603 = pneg %p178
        %p604 = pneg %p175
        %s605 = sand.u32 %s37, 1
        %s606 = scalar_lea.sflag [#allocation12], %s605
        %s607 = sand.u32 %s193, 1
        %s608 = smul.addr %s607, 8
        %s609 = scalar_lea.vmem [#allocation13], %s608
        %p610 = pneg %p206
        %p611 = pneg %p203
        %s612 = sand.u32 %s37, 1
        %s613 = scalar_lea.sflag [#allocation15], %s612
        %s614 = sand.u32 %s221, 1
        %s615 = smul.addr %s614, 8
        %s616 = scalar_lea.vmem [#allocation14], %s615
        %p617 = pneg %p234
        %p618 = pneg %p231
        %s619 = sand.u32 %s37, 1
        %s620 = scalar_lea.sflag [#allocation15], %s619
        %s621 = sand.u32 %s249, 1
        %s622 = smul.addr %s621, 8
        %s623 = scalar_lea.vmem [#allocation16], %s622
        %p624 = pneg %p262
        %p625 = pneg %p259
        %s626 = sand.u32 %s277, 1
        %s627 = scalar_lea.sflag [#allocation18], %s626
        %s628 = sand.u32 %s277, 1
        %s629 = smul.addr %s628, 8
        %s630 = scalar_lea.vmem [#allocation17], %s629
        %p631 = pneg %p290
        %p632 = pneg %p287
        %p633 = pneg %p320
        %p634 = pneg %p317
        %s635 = sand.u32 %s307, 1
        %s636 = scalar_lea.sflag [#allocation7], %s635
        %s637 = sand.u32 %s307, 1
        %s638 = smul.addr %s637, 8
        %s639 = scalar_lea.vmem [#allocation19], %s638
        %p640 = scmp.eq.s32.totalorder %s46, 0
        // Predicated region
        $region85: #{decoder_layer.9} parent=51 // pred_check
          %p641 = pneg %p640
        $region86: #{decoder_layer.9} parent=51 // pred_check_branch
          %643 = sbr.rel (%p641) target = $region88
        $region87: #{decoder_layer.9} parent=51 // pred_region
          %vm644 = vcmask 7168
          %645 = vst.msk [vmem:[#allocation2] sm:$0xff] %vm644, -inf
          %646 = vst.msk [vmem:[#allocation3] sm:$0xff] %vm644, 0.0
          %vm647 = vcmask 130048
          %648 = vst.msk [vmem:[#allocation4] sm:$0xff] %vm647, 0.0
        $region88: #{decoder_layer.9} parent=51 // pred_fallthru
          _
        %v649 = vld [vmem:[%s509] sm:$0xff]
        %v650 = vld [vmem:[%s545] sm:$0xff]
        %v651 = vld [vmem:[%s554] sm:$0xff]
        %v652 = vsub.f32 0.0, %v649
        %654 = vrot.lane.b32.xlu0 %v652, 120
        %v655 = vpop.permute.xlu0 %654
        %658 = vrot.lane.b32.xlu0 %v649, 8
        %v659 = vpop.permute.xlu0 %658
        %vm661 = vcmask 64512
        %v662 = vsel %vm661, %v655, %v659
        %v663 = vmul.f32 %v649, %v650
        %v664 = vmul.f32 %v662, %v651
        %v665 = vadd.f32 %v663, %v664
        %v666 = vld [vmem:[%s518] sm:$0xff]
        %v667 = vld [vmem:[%s563] sm:$0xff]
        %v668 = vld [vmem:[%s572] sm:$0xff]
        %v669 = vsub.f32 0.0, %v666
        %671 = vrot.lane.b32.xlu0 %v669, 120
        %v672 = vpop.permute.xlu0 %671
        %675 = vrot.lane.b32.xlu0 %v666, 8
        %v676 = vpop.permute.xlu0 %675
        %v678 = vsel %vm661, %v672, %v676
        %v679 = vmul.f32 %v666, %v667
        %v680 = vmul.f32 %v678, %v668
        %v681 = vadd.f32 %v679, %v680
        %v682 = vld [vmem:[%s527] sm:$0xff]
        %v683 = vld [vmem:[%s536] sm:$0xff]
        %vm684 = vcmask 130048
        %v686 = vsel %vm684, %v665, 0
        %v689 = vsel %vm684, %v681, 0
        %691 = vmatprep.subr.mxu0 0.0
        %692 = vmatpush1.xpose.msra.mxu0 %v689
        %693 = vmatprep.subr.mxu0 0.0
        %694 = vmatpush1.xpose.msra.mxu0 0.0
        %695 = vmatprep.subr.mxu0 0.0
        %696 = vmatpush1.xpose.msra.mxu0 0.0
        %697 = vmatprep.subr.mxu0 0.0
        %698 = vmatpush1.xpose.msra.mxu0 0.0
        %699 = vmatprep.subr.mxu0 0.0
        %700 = vmatpush1.xpose.msra.mxu0 0.0
        %701 = vmatprep.subr.mxu0 0.0
        %702 = vmatpush1.xpose.msra.mxu0 0.0
        %703 = vmatprep.subr.mxu0 0.0
        %704 = vmatpush1.xpose.msra.mxu0 0.0
        %705 = vmatprep.subr.mxu0 0.0
        %706 = vmatpush1.xpose.msra.mxu0 0.0
        %707 = vmatprep.subr.mxu0 0.0
        %708 = vmatpush1.xpose.msra.mxu0 0.0
        %709 = vmatprep.subr.mxu0 0.0
        %710 = vmatpush1.xpose.msra.mxu0 0.0
        %711 = vmatprep.subr.mxu0 0.0
        %712 = vmatpush1.xpose.msra.mxu0 0.0
        %713 = vmatprep.subr.mxu0 0.0
        %714 = vmatpush1.xpose.msra.mxu0 0.0
        %715 = vmatprep.subr.mxu0 0.0
        %716 = vmatpush1.xpose.msra.mxu0 0.0
        %717 = vmatprep.subr.mxu0 0.0
        %718 = vmatpush1.xpose.msra.mxu0 0.0
        %719 = vmatprep.subr.mxu0 0.0
        %720 = vmatpush1.xpose.msra.mxu0 0.0
        %721 = vmatprep.subr.mxu0 0.0
        %722 = vmatpush1.xpose.msra.mxu0 0.0
        %723 = vmatprep.subr.mxu0 0.0
        %724 = vmatpush1.xpose.msra.mxu0 0.0
        %725 = vmatprep.subr.mxu0 0.0
        %726 = vmatpush1.xpose.msra.mxu0 0.0
        %727 = vmatprep.subr.mxu0 0.0
        %728 = vmatpush1.xpose.msra.mxu0 0.0
        %729 = vmatprep.subr.mxu0 0.0
        %730 = vmatpush1.xpose.msra.mxu0 0.0
        %731 = vmatprep.subr.mxu0 0.0
        %732 = vmatpush1.xpose.msra.mxu0 0.0
        %733 = vmatprep.subr.mxu0 0.0
        %734 = vmatpush1.xpose.msra.mxu0 0.0
        %735 = vmatprep.subr.mxu0 0.0
        %736 = vmatpush1.xpose.msra.mxu0 0.0
        %737 = vmatprep.subr.mxu0 0.0
        %738 = vmatpush1.xpose.msra.mxu0 0.0
        %739 = vmatprep.subr.mxu0 0.0
        %740 = vmatpush1.xpose.msra.mxu0 0.0
        %741 = vmatprep.subr.mxu0 0.0
        %742 = vmatpush1.xpose.msra.mxu0 0.0
        %743 = vmatprep.subr.mxu0 0.0
        %744 = vmatpush1.xpose.msra.mxu0 0.0
        %745 = vmatprep.subr.mxu0 0.0
        %746 = vmatpush1.xpose.msra.mxu0 0.0
        %747 = vmatprep.subr.mxu0 0.0
        %748 = vmatpush1.xpose.msra.mxu0 0.0
        %749 = vmatprep.subr.mxu0 0.0
        %750 = vmatpush1.xpose.msra.mxu0 0.0
        %751 = vmatprep.subr.mxu0 0.0
        %752 = vmatpush1.xpose.msra.mxu0 0.0
        %753 = vmatprep.subr.mxu0 0.0
        %754 = vmatpush1.xpose.msra.mxu0 0.0
        %755 = vmatprep.mubr.f32.mxu0 0.0
        %756 = vmatmul.mubr.f32.gmra.mrb[0].mxu0 %v686
        %v757 = vpop.f32.mrb[0].mxu0
        %v758 = vadd.f32 0.0, %v757
        %v759 = vpop.f32.mrb[0].mxu0
        %760 = vdwg.mxu0
        %v761 = vmul.f32 %v758, 0.25
        %v762 = vadd.f32 %v761, %v683
        %v763 = vld [vmem:[#allocation2] sm:$0xff]
        %v764 = vsel %vm661, %v762, -inf
        %765 = vmax.xlane.f32.xlu0 %v764
        %v766 = vpop.xlane.xlu0 %765
        %v767 = vmax.f32 %v763, %v766
        %v768 = vsub.f32 %v763, %v767
        %v769 = vmul.f32 %v768, 1.442695
        %v770 = vpow.pop %v769
        %772 = vset.pattern.permute.xlu0 0
        %773 = vperm.xlu0 %772, %v767
        %v774 = vpop.permute.xlu0 %773
        %v776 = vsub.f32 %v762, %v774
        %v777 = vmul.f32 %v776, 1.442695
        %v778 = vpow.pop %v777
        %v779 = vld [vmem:[#allocation3] sm:$0xff]
        %v780 = vmul.f32 %v770, %v779
        %v781 = vsel %vm661, %v778, 0.0
        %782 = vadd.xlane.f32.xlu0 %v781
        %v783 = vpop.xlane.xlu0 %782
        %v784 = vadd.f32 %v780, %v783
        %vm785 = vcmask 7168
        %786 = vst.msk [vmem:[#allocation3] sm:$0xff] %vm785, %v784
        %v787 = vld [vmem:[#allocation4] sm:$0xff]
        %789 = vset.pattern.permute.xlu0 0
        %790 = vperm.xlu0 %789, %v770
        %v791 = vpop.permute.xlu0 %790
        %v793 = vmul.f32 %v791, %v787
        %v795 = vsel %vm661, %v778, 0
        %797 = vmatprep.subr.mxu0 0.0
        %798 = vmatpush1.msra.mxu0 %v682
        %799 = vmatprep.subr.mxu0 0.0
        %800 = vmatpush1.msra.mxu0 0.0
        %801 = vmatprep.subr.mxu0 0.0
        %802 = vmatpush1.msra.mxu0 0.0
        %803 = vmatprep.subr.mxu0 0.0
        %804 = vmatpush1.msra.mxu0 0.0
        %805 = vmatprep.subr.mxu0 0.0
        %806 = vmatpush1.msra.mxu0 0.0
        %807 = vmatprep.subr.mxu0 0.0
        %808 = vmatpush1.msra.mxu0 0.0
        %809 = vmatprep.subr.mxu0 0.0
        %810 = vmatpush1.msra.mxu0 0.0
        %811 = vmatprep.subr.mxu0 0.0
        %812 = vmatpush1.msra.mxu0 0.0
        %813 = vmatprep.subr.mxu0 0.0
        %814 = vmatpush1.msra.mxu0 0.0
        %815 = vmatprep.subr.mxu0 0.0
        %816 = vmatpush1.msra.mxu0 0.0
        %817 = vmatprep.subr.mxu0 0.0
        %818 = vmatpush1.msra.mxu0 0.0
        %819 = vmatprep.subr.mxu0 0.0
        %820 = vmatpush1.msra.mxu0 0.0
        %821 = vmatprep.subr.mxu0 0.0
        %822 = vmatpush1.msra.mxu0 0.0
        %823 = vmatprep.subr.mxu0 0.0
        %824 = vmatpush1.msra.mxu0 0.0
        %825 = vmatprep.subr.mxu0 0.0
        %826 = vmatpush1.msra.mxu0 0.0
        %827 = vmatprep.subr.mxu0 0.0
        %828 = vmatpush1.msra.mxu0 0.0
        %829 = vmatprep.subr.mxu0 0.0
        %830 = vmatpush1.msra.mxu0 0.0
        %831 = vmatprep.subr.mxu0 0.0
        %832 = vmatpush1.msra.mxu0 0.0
        %833 = vmatprep.subr.mxu0 0.0
        %834 = vmatpush1.msra.mxu0 0.0
        %835 = vmatprep.subr.mxu0 0.0
        %836 = vmatpush1.msra.mxu0 0.0
        %837 = vmatprep.subr.mxu0 0.0
        %838 = vmatpush1.msra.mxu0 0.0
        %839 = vmatprep.subr.mxu0 0.0
        %840 = vmatpush1.msra.mxu0 0.0
        %841 = vmatprep.subr.mxu0 0.0
        %842 = vmatpush1.msra.mxu0 0.0
        %843 = vmatprep.subr.mxu0 0.0
        %844 = vmatpush1.msra.mxu0 0.0
        %845 = vmatprep.subr.mxu0 0.0
        %846 = vmatpush1.msra.mxu0 0.0
        %847 = vmatprep.subr.mxu0 0.0
        %848 = vmatpush1.msra.mxu0 0.0
        %849 = vmatprep.subr.mxu0 0.0
        %850 = vmatpush1.msra.mxu0 0.0
        %851 = vmatprep.subr.mxu0 0.0
        %852 = vmatpush1.msra.mxu0 0.0
        %853 = vmatprep.subr.mxu0 0.0
        %854 = vmatpush1.msra.mxu0 0.0
        %855 = vmatprep.subr.mxu0 0.0
        %856 = vmatpush1.msra.mxu0 0.0
        %857 = vmatprep.subr.mxu0 0.0
        %858 = vmatpush1.msra.mxu0 0.0
        %859 = vmatprep.subr.mxu0 0.0
        %860 = vmatpush1.msra.mxu0 0.0
        %861 = vmatprep.mubr.f32.mxu0 0.0
        %862 = vmatmul.mubr.f32.gmra.mrb[0].mxu0 %v795
        %v863 = vpop.f32.mrb[0].mxu0
        %v864 = vadd.f32 0.0, %v863
        %v865 = vpop.f32.mrb[0].mxu0
        %866 = vdwg.mxu0
        %v867 = vadd.f32 %v793, %v864
        %868 = vst.msk [vmem:[#allocation4] sm:$0xff] %vm684, %v867
        %869 = vst.msk [vmem:[#allocation2] sm:$0xff] %vm785, %v767
        // Predicated region
        $region89: #{decoder_layer.9} parent=51 // pred_check
          %p870 = pneg %p640
        $region90: #{decoder_layer.9} parent=51 // pred_check_branch
          %872 = sbr.rel (%p870) target = $region92
        $region91: #{decoder_layer.9} parent=51 // pred_region
          %v873 = vld [vmem:[#allocation3] sm:$0xff]
          %v874 = vrcp.pop %v873
          %v875 = vld [vmem:[#allocation4] sm:$0xff]
          %877 = vset.pattern.permute.xlu0 0
          %878 = vperm.xlu0 %877, %v874
          %v879 = vpop.permute.xlu0 %878
          %v881 = vmul.f32 %v875, %v879
          %882 = vst.msk [vmem:[%s639] sm:$0xff] %vm684, %v881
        $region92: #{decoder_layer.9} parent=51 // pred_fallthru
          _
        %s883 = sand.u32 %s307, 1
        %s884 = scalar_lea.sflag [#allocation7], %s883
        %s885 = sand.u32 %s307, 1
        %s886 = smul.addr %s885, 8
        %s887 = scalar_lea.vmem [#allocation19], %s886
        // Predicated region
        $region93: #{decoder_layer.9} parent=51 // pred_check
          %p888 = pneg %p317
        $region94: #{decoder_layer.9} parent=51 // pred_check_branch
          %890 = sbr.rel (%p888) target = $region96
        $region95: #{decoder_layer.9} parent=51 // pred_region
          %s892 = ssub.s32 128, 128
          %893 = vsyncadd %s884, %s892
          %s894 = sadd.s32 %s45, %s44
          %s895 = smul.addr %s43, 2
          %s896 = sadd.s32 %s894, %s895
          %s897 = smul.addr %s896, 128
          %s898 = scalar_lea.hbm %s8, %s897
          %s900 = sshll.u32 %s887, 4
          %s901 = int_to_ptr.vmem [resolvable:$true] %s900
          %903 = dma.vmem_to_hbm [thread:$0]  %s901, 128, %s898, %s884
        $region96: #{decoder_layer.9} parent=51 // pred_fallthru
          _
      $region52: #{decoder_layer.9} parent=5 // pred_fallthru
        _
      %p904 = scmp.le.s32.totalorder 2, %s32
      // Predicated region
      $region97: #{decoder_layer.9} parent=5 // pred_check
        %p905 = pneg %p904
      $region98: #{decoder_layer.9} parent=5 // pred_check_branch
        %907 = sbr.rel (%p905) target = $region100
      $region99: #{decoder_layer.9} parent=5 // pred_region
        %s908 = ssub.s32 %s32, 2
        // Predicated region
        $region101: #{decoder_layer.9} parent=99 // pred_check
          %p909 = pneg %p323
        $region102: #{decoder_layer.9} parent=99 // pred_check_branch
          %911 = sbr.rel (%p909) target = $region104
        $region103: #{decoder_layer.9} parent=99 // pred_region
          %s912 = sand.u32 %s308, 1
          %s913 = scalar_lea.sflag [#allocation7], %s912
          %s914 = sand.u32 %s308, 1
          %s915 = smul.addr %s914, 8
          %s916 = scalar_lea.vmem [#allocation19], %s915
          %917 = dma.done %s913, 128
        $region104: #{decoder_layer.9} parent=99 // pred_fallthru
          _
      $region100: #{decoder_layer.9} parent=5 // pred_fallthru
        _
    $region6: #{decoder_layer.9} parent=1 // loop_footer
      %s36 = sadd.s32 1, %s32
    $region7: #{decoder_layer.9} parent=1 // loop_footer_branch
      %31 = sbr.rel target = $region3
    $region8: #{decoder_layer.9} parent=1 // loop_exit
      _
    %918 = vsyncpa [#allocation6], 1
    %s919 = scalar_lea.sflag [#allocation6], 1
    %920 = vsyncpa %s919, 1
    %921 = vsyncpa [#allocation9], 1
    %s922 = scalar_lea.sflag [#allocation9], 1
    %923 = vsyncpa %s922, 1
    %924 = vsyncpa [#allocation12], 1
    %s925 = scalar_lea.sflag [#allocation12], 1
    %926 = vsyncpa %s925, 1
    %927 = vsyncpa [#allocation15], 1
    %s928 = scalar_lea.sflag [#allocation15], 1
    %929 = vsyncpa %s928, 1
    %930 = vsyncpa [#allocation18], 1
    %s931 = scalar_lea.sflag [#allocation18], 1
    %932 = vsyncpa %s931, 1
    %933 = vsyncpa [#allocation7], 1
    %s934 = scalar_lea.sflag [#allocation7], 1
    %935 = vsyncpa %s934, 1

// kernel: decoder_layer.12
$region0: #{decoder_layer.12}
  #allocation0 [shape = 'u32[]', space=smem, size = 0x4, offset = 0x4, fixed_abs, tag = 'smem constant byte address 0x4 - core index']
  #allocation1 [shape = 'u32[144,128]{1,0:T(1,128)}', space=vmem, size = 0x12000, scoped, tag = 'internal scratch']
  #allocation2 [shape = 'f32[16,64]{1,0:T(8,128)}', space=vmem, size = 0x2000, scoped, tag = 'scratch operand']
  #allocation3 [shape = 'f32[16,64]{1,0:T(8,128)}', space=vmem, size = 0x2000, scoped, tag = 'scratch operand']
  %s0 = inlined_call_operand.hbm [shape: f32[16,32], index: 0, kind: input, shape index: {}]
  %s1 = inlined_call_operand.hbm [shape: f32[16,1], index: 1, kind: input, shape index: {}]
  %s2 = inlined_call_operand.hbm [shape: f32[1,32], index: 2, kind: input, shape index: {}]
  %s3 = inlined_call_operand.hbm [shape: f32[32,64], index: 3, kind: input, shape index: {}]
  %s4 = inlined_call_operand.hbm [shape: f32[32,64], index: 4, kind: input, shape index: {}]
  %s5 = inlined_call_operand.hbm [shape: f32[16,64], index: 5, kind: output, shape index: {}]
  %s6 = sld [smem:[#allocation0]]
  $region58: #{decoder_layer.12} parent=0
    _
  %s8 = ssub.s32 1, %s6
  %s9 = scalar_select 0, %s8, %s6
  $region1: #{decoder_layer.12} parent=0
    #allocation4 [shape = 'u8[8192]{0}', space=vmem, size = 0x2000, scoped, tag = 'input window, operand 0, single buffered']
    #allocation5 [shape = 's32[1]{0}', space=sflag, size = 0x4, scoped, tag = 'scoped memory for decoder_layer.12']
    #allocation6 [shape = 's32[1]{0}', space=sflag, size = 0x4, scoped, tag = 'scoped memory for decoder_layer.12']
    #allocation7 [shape = 'u8[8192]{0}', space=vmem, size = 0x2000, scoped, tag = 'input window, operand 1, single buffered']
    #allocation8 [shape = 's32[1]{0}', space=sflag, size = 0x4, scoped, tag = 'scoped memory for decoder_layer.12']
    #allocation9 [shape = 'u8[512]{0}', space=vmem, size = 0x400, scoped, tag = 'input window, operand 2, single buffered']
    #allocation10 [shape = 'u8[16384]{0}', space=vmem, size = 0x4000, scoped, tag = 'input window, operand 3, single buffered']
    #allocation11 [shape = 's32[1]{0}', space=sflag, size = 0x4, scoped, tag = 'scoped memory for decoder_layer.12']
    #allocation12 [shape = 'u8[16384]{0}', space=vmem, size = 0x4000, scoped, tag = 'input window, operand 4, single buffered']
    #allocation13 [shape = 'u8[8192]{0}', space=vmem, size = 0x2000, scoped, tag = 'output window, operand 0, single buffered']
    %10 = vsyncpa [#allocation5], 0
    %11 = vsyncpa [#allocation8], 0
    %12 = vsyncpa [#allocation11], 0
    %13 = vsyncpa [#allocation6], 0
    // Predicated region
    $region2: #{decoder_layer.12} parent=1 // pred_check
      _
    $region3: #{decoder_layer.12} parent=1 // pred_check_branch
      %15 = sbr.rel (0) target = $region5
    $region4: #{decoder_layer.12} parent=1 // pred_region
      %s17 = ssub.s32 256, 256
      %18 = vsyncadd [#allocation5], %s17
      %s19 = sshll.u32 [#allocation4], 4
      %s20 = int_to_ptr.vmem [resolvable:$true] %s19
      %25 = dma.hbm_to_vmem [thread:$0]  %s0, 256, %s20, [#allocation5], 128, 128, 8
    $region5: #{decoder_layer.12} parent=1 // pred_fallthru
      _
    // Predicated region
    $region6: #{decoder_layer.12} parent=1 // pred_check
      _
    $region7: #{decoder_layer.12} parent=1 // pred_check_branch
      %27 = sbr.rel (0) target = $region9
    $region8: #{decoder_layer.12} parent=1 // pred_region
      %s29 = ssub.s32 256, 256
      %30 = vsyncadd [#allocation8], %s29
      %s31 = sshll.u32 [#allocation7], 4
      %s32 = int_to_ptr.vmem [resolvable:$true] %s31
      %37 = dma.hbm_to_vmem [thread:$0]  %s1, 256, %s32, [#allocation8], 128, 128, 8
    $region9: #{decoder_layer.12} parent=1 // pred_fallthru
      _
    // Predicated region
    $region10: #{decoder_layer.12} parent=1 // pred_check
      _
    $region11: #{decoder_layer.12} parent=1 // pred_check_branch
      %39 = sbr.rel (0) target = $region13
    $region12: #{decoder_layer.12} parent=1 // pred_region
      %s41 = ssub.s32 16, 16
      %42 = vsyncadd [#allocation8], %s41
      %s44 = sshll.u32 [#allocation9], 4
      %s45 = int_to_ptr.vmem [resolvable:$true] %s44
      %47 = dma.hbm_to_vmem [thread:$0]  %s2, 16, %s45, [#allocation8]
    $region13: #{decoder_layer.12} parent=1 // pred_fallthru
      _
    // Predicated region
    $region14: #{decoder_layer.12} parent=1 // pred_check
      _
    $region15: #{decoder_layer.12} parent=1 // pred_check_branch
      %49 = sbr.rel (0) target = $region17
    $region16: #{decoder_layer.12} parent=1 // pred_region
      %s51 = ssub.s32 512, 512
      %52 = vsyncadd [#allocation11], %s51
      %s53 = sshll.u32 [#allocation10], 4
      %s54 = int_to_ptr.vmem [resolvable:$true] %s53
      %59 = dma.hbm_to_vmem [thread:$0]  %s3, 512, %s54, [#allocation11], 128, 128, 8
    $region17: #{decoder_layer.12} parent=1 // pred_fallthru
      _
    // Predicated region
    $region18: #{decoder_layer.12} parent=1 // pred_check
      _
    $region19: #{decoder_layer.12} parent=1 // pred_check_branch
      %61 = sbr.rel (0) target = $region21
    $region20: #{decoder_layer.12} parent=1 // pred_region
      %s63 = ssub.s32 512, 512
      %64 = vsyncadd [#allocation11], %s63
      %s65 = sshll.u32 [#allocation12], 4
      %s66 = int_to_ptr.vmem [resolvable:$true] %s65
      %71 = dma.hbm_to_vmem [thread:$0]  %s4, 512, %s66, [#allocation11], 128, 128, 8
    $region21: #{decoder_layer.12} parent=1 // pred_fallthru
      _
    // Predicated region
    $region22: #{decoder_layer.12} parent=1 // pred_check
      _
    $region23: #{decoder_layer.12} parent=1 // pred_check_branch
      %73 = sbr.rel (0) target = $region25
    $region24: #{decoder_layer.12} parent=1 // pred_region
      %74 = dma.done [#allocation5], 256
    $region25: #{decoder_layer.12} parent=1 // pred_fallthru
      _
    // Predicated region
    $region26: #{decoder_layer.12} parent=1 // pred_check
      _
    $region27: #{decoder_layer.12} parent=1 // pred_check_branch
      %76 = sbr.rel (0) target = $region29
    $region28: #{decoder_layer.12} parent=1 // pred_region
      %77 = dma.done [#allocation8], 256
    $region29: #{decoder_layer.12} parent=1 // pred_fallthru
      _
    // Predicated region
    $region30: #{decoder_layer.12} parent=1 // pred_check
      _
    $region31: #{decoder_layer.12} parent=1 // pred_check_branch
      %79 = sbr.rel (0) target = $region33
    $region32: #{decoder_layer.12} parent=1 // pred_region
      %80 = dma.done [#allocation8], 16
    $region33: #{decoder_layer.12} parent=1 // pred_fallthru
      _
    // Predicated region
    $region34: #{decoder_layer.12} parent=1 // pred_check
      _
    $region35: #{decoder_layer.12} parent=1 // pred_check_branch
      %82 = sbr.rel (0) target = $region37
    $region36: #{decoder_layer.12} parent=1 // pred_region
      %83 = dma.done [#allocation11], 512
    $region37: #{decoder_layer.12} parent=1 // pred_fallthru
      _
    // Predicated region
    $region38: #{decoder_layer.12} parent=1 // pred_check
      _
    $region39: #{decoder_layer.12} parent=1 // pred_check_branch
      %85 = sbr.rel (0) target = $region41
    $region40: #{decoder_layer.12} parent=1 // pred_region
      %86 = dma.done [#allocation11], 512
    $region41: #{decoder_layer.12} parent=1 // pred_fallthru
      _
    %p87 = scmp.eq.s32.totalorder 0, 0
    // Predicated region
    $region42: #{decoder_layer.12} parent=1 // pred_check
      %p88 = pneg %p87
    $region43: #{decoder_layer.12} parent=1 // pred_check_branch
      %90 = sbr.rel (%p88) target = $region45
    $region44: #{decoder_layer.12} parent=1 // pred_region
      %vm91 = vcmask 523264
      %92 = vst.msk [vmem:[#allocation2] sm:$0xff] %vm91, 0.0
      %93 = vst.msk [vmem:[#allocation2 + $0x8] sm:$0xff] %vm91, 0.0
      %94 = vst.msk [vmem:[#allocation3] sm:$0xff] %vm91, 0.0
      %95 = vst.msk [vmem:[#allocation3 + $0x8] sm:$0xff] %vm91, 0.0
    $region45: #{decoder_layer.12} parent=1 // pred_fallthru
      _
    %v96 = vld [vmem:[#allocation4] sm:$0xff]
    %v97 = vld [vmem:[#allocation4 + $0x8] sm:$0xff]
    %v98 = vld [vmem:[#allocation7] sm:$0xff]
    %v99 = vld [vmem:[#allocation7 + $0x8] sm:$0xff]
    %101 = vset.pattern.permute.xlu0 0
    %102 = vperm.xlu0 %101, %v98
    %v103 = vpop.permute.xlu0 %102
    %106 = vset.pattern.permute.xlu0 0
    %107 = vperm.xlu0 %106, %v99
    %v108 = vpop.permute.xlu0 %107
    %v110 = vmul.f32 %v96, %v103
    %v111 = vmul.f32 %v97, %v108
    %v112 = vld [vmem:[#allocation9] sm:$0x1]
    %v114 = vlaneseq
    %v115 = vshrl.u32 %v114, 7
    %v116 = vsub.s32 0, %v115
    %v117 = vrot.slane %v112, %v116
    %v119 = vmul.f32 %v110, %v117
    %v120 = vmul.f32 %v111, %v117
    %v121 = vld [vmem:[#allocation2] sm:$0xff]
    %v122 = vld [vmem:[#allocation2 + $0x8] sm:$0xff]
    %v123 = vld [vmem:[#allocation10] sm:$0xff]
    %v124 = vld [vmem:[#allocation10 + $0x8] sm:$0xff]
    %v125 = vld [vmem:[#allocation10 + $0x10] sm:$0xff]
    %v126 = vld [vmem:[#allocation10 + $0x18] sm:$0xff]
    %vm127 = vcmask 261120
    %v129 = vsel %vm127, %v119, 0
    %v132 = vsel %vm127, %v120, 0
    %134 = vmatprep.subr.mxu0 0.0
    %135 = vmatpush1.msra.mxu0 %v123
    %136 = vmatprep.subr.mxu0 0.0
    %137 = vmatpush1.msra.mxu0 %v124
    %138 = vmatprep.subr.mxu0 0.0
    %139 = vmatpush1.msra.mxu0 %v125
    %140 = vmatprep.subr.mxu0 0.0
    %141 = vmatpush1.msra.mxu0 %v126
    %142 = vmatprep.subr.mxu0 0.0
    %143 = vmatpush1.msra.mxu0 0.0
    %144 = vmatprep.subr.mxu0 0.0
    %145 = vmatpush1.msra.mxu0 0.0
    %146 = vmatprep.subr.mxu0 0.0
    %147 = vmatpush1.msra.mxu0 0.0
    %148 = vmatprep.subr.mxu0 0.0
    %149 = vmatpush1.msra.mxu0 0.0
    %150 = vmatprep.subr.mxu0 0.0
    %151 = vmatpush1.msra.mxu0 0.0
    %152 = vmatprep.subr.mxu0 0.0
    %153 = vmatpush1.msra.mxu0 0.0
    %154 = vmatprep.subr.mxu0 0.0
    %155 = vmatpush1.msra.mxu0 0.0
    %156 = vmatprep.subr.mxu0 0.0
    %157 = vmatpush1.msra.mxu0 0.0
    %158 = vmatprep.subr.mxu0 0.0
    %159 = vmatpush1.msra.mxu0 0.0
    %160 = vmatprep.subr.mxu0 0.0
    %161 = vmatpush1.msra.mxu0 0.0
    %162 = vmatprep.subr.mxu0 0.0
    %163 = vmatpush1.msra.mxu0 0.0
    %164 = vmatprep.subr.mxu0 0.0
    %165 = vmatpush1.msra.mxu0 0.0
    %166 = vmatprep.subr.mxu0 0.0
    %167 = vmatpush1.msra.mxu0 0.0
    %168 = vmatprep.subr.mxu0 0.0
    %169 = vmatpush1.msra.mxu0 0.0
    %170 = vmatprep.subr.mxu0 0.0
    %171 = vmatpush1.msra.mxu0 0.0
    %172 = vmatprep.subr.mxu0 0.0
    %173 = vmatpush1.msra.mxu0 0.0
    %174 = vmatprep.subr.mxu0 0.0
    %175 = vmatpush1.msra.mxu0 0.0
    %176 = vmatprep.subr.mxu0 0.0
    %177 = vmatpush1.msra.mxu0 0.0
    %178 = vmatprep.subr.mxu0 0.0
    %179 = vmatpush1.msra.mxu0 0.0
    %180 = vmatprep.subr.mxu0 0.0
    %181 = vmatpush1.msra.mxu0 0.0
    %182 = vmatprep.subr.mxu0 0.0
    %183 = vmatpush1.msra.mxu0 0.0
    %184 = vmatprep.subr.mxu0 0.0
    %185 = vmatpush1.msra.mxu0 0.0
    %186 = vmatprep.subr.mxu0 0.0
    %187 = vmatpush1.msra.mxu0 0.0
    %188 = vmatprep.subr.mxu0 0.0
    %189 = vmatpush1.msra.mxu0 0.0
    %190 = vmatprep.subr.mxu0 0.0
    %191 = vmatpush1.msra.mxu0 0.0
    %192 = vmatprep.subr.mxu0 0.0
    %193 = vmatpush1.msra.mxu0 0.0
    %194 = vmatprep.subr.mxu0 0.0
    %195 = vmatpush1.msra.mxu0 0.0
    %196 = vmatprep.subr.mxu0 0.0
    %197 = vmatpush1.msra.mxu0 0.0
    %198 = vmatprep.mubr.f32.mxu0 0.0
    %199 = vmatmul.mubr.f32.gmra.mrb[0].mxu0 %v129
    %v200 = vpop.f32.mrb[0].mxu0
    %v201 = vadd.f32 0.0, %v200
    %v202 = vpop.f32.mrb[0].mxu0
    %203 = vmatprep.mubr.f32.mxu0 0.0
    %204 = vmatmul.mubr.f32.gmra.mrb[0].mxu0 %v132
    %v205 = vpop.f32.mrb[0].mxu0
    %v206 = vadd.f32 0.0, %v205
    %v207 = vpop.f32.mrb[0].mxu0
    %208 = vdwg.mxu0
    %v209 = vadd.f32 %v121, %v201
    %v210 = vadd.f32 %v122, %v206
    %vm211 = vcmask 523264
    %212 = vst.msk [vmem:[#allocation2] sm:$0xff] %vm211, %v209
    %213 = vst.msk [vmem:[#allocation2 + $0x8] sm:$0xff] %vm211, %v210
    %v214 = vld [vmem:[#allocation3] sm:$0xff]
    %v215 = vld [vmem:[#allocation3 + $0x8] sm:$0xff]
    %v216 = vld [vmem:[#allocation12] sm:$0xff]
    %v217 = vld [vmem:[#allocation12 + $0x8] sm:$0xff]
    %v218 = vld [vmem:[#allocation12 + $0x10] sm:$0xff]
    %v219 = vld [vmem:[#allocation12 + $0x18] sm:$0xff]
    %220 = vmatprep.subr.mxu0 0.0
    %221 = vmatpush1.msra.mxu0 %v216
    %222 = vmatprep.subr.mxu0 0.0
    %223 = vmatpush1.msra.mxu0 %v217
    %224 = vmatprep.subr.mxu0 0.0
    %225 = vmatpush1.msra.mxu0 %v218
    %226 = vmatprep.subr.mxu0 0.0
    %227 = vmatpush1.msra.mxu0 %v219
    %228 = vmatprep.subr.mxu0 0.0
    %229 = vmatpush1.msra.mxu0 0.0
    %230 = vmatprep.subr.mxu0 0.0
    %231 = vmatpush1.msra.mxu0 0.0
    %232 = vmatprep.subr.mxu0 0.0
    %233 = vmatpush1.msra.mxu0 0.0
    %234 = vmatprep.subr.mxu0 0.0
    %235 = vmatpush1.msra.mxu0 0.0
    %236 = vmatprep.subr.mxu0 0.0
    %237 = vmatpush1.msra.mxu0 0.0
    %238 = vmatprep.subr.mxu0 0.0
    %239 = vmatpush1.msra.mxu0 0.0
    %240 = vmatprep.subr.mxu0 0.0
    %241 = vmatpush1.msra.mxu0 0.0
    %242 = vmatprep.subr.mxu0 0.0
    %243 = vmatpush1.msra.mxu0 0.0
    %244 = vmatprep.subr.mxu0 0.0
    %245 = vmatpush1.msra.mxu0 0.0
    %246 = vmatprep.subr.mxu0 0.0
    %247 = vmatpush1.msra.mxu0 0.0
    %248 = vmatprep.subr.mxu0 0.0
    %249 = vmatpush1.msra.mxu0 0.0
    %250 = vmatprep.subr.mxu0 0.0
    %251 = vmatpush1.msra.mxu0 0.0
    %252 = vmatprep.subr.mxu0 0.0
    %253 = vmatpush1.msra.mxu0 0.0
    %254 = vmatprep.subr.mxu0 0.0
    %255 = vmatpush1.msra.mxu0 0.0
    %256 = vmatprep.subr.mxu0 0.0
    %257 = vmatpush1.msra.mxu0 0.0
    %258 = vmatprep.subr.mxu0 0.0
    %259 = vmatpush1.msra.mxu0 0.0
    %260 = vmatprep.subr.mxu0 0.0
    %261 = vmatpush1.msra.mxu0 0.0
    %262 = vmatprep.subr.mxu0 0.0
    %263 = vmatpush1.msra.mxu0 0.0
    %264 = vmatprep.subr.mxu0 0.0
    %265 = vmatpush1.msra.mxu0 0.0
    %266 = vmatprep.subr.mxu0 0.0
    %267 = vmatpush1.msra.mxu0 0.0
    %268 = vmatprep.subr.mxu0 0.0
    %269 = vmatpush1.msra.mxu0 0.0
    %270 = vmatprep.subr.mxu0 0.0
    %271 = vmatpush1.msra.mxu0 0.0
    %272 = vmatprep.subr.mxu0 0.0
    %273 = vmatpush1.msra.mxu0 0.0
    %274 = vmatprep.subr.mxu0 0.0
    %275 = vmatpush1.msra.mxu0 0.0
    %276 = vmatprep.subr.mxu0 0.0
    %277 = vmatpush1.msra.mxu0 0.0
    %278 = vmatprep.subr.mxu0 0.0
    %279 = vmatpush1.msra.mxu0 0.0
    %280 = vmatprep.subr.mxu0 0.0
    %281 = vmatpush1.msra.mxu0 0.0
    %282 = vmatprep.subr.mxu0 0.0
    %283 = vmatpush1.msra.mxu0 0.0
    %284 = vmatprep.mubr.f32.mxu0 0.0
    %285 = vmatmul.mubr.f32.gmra.mrb[0].mxu0 %v129
    %v286 = vpop.f32.mrb[0].mxu0
    %v287 = vadd.f32 0.0, %v286
    %v288 = vpop.f32.mrb[0].mxu0
    %289 = vmatprep.mubr.f32.mxu0 0.0
    %290 = vmatmul.mubr.f32.gmra.mrb[0].mxu0 %v132
    %v291 = vpop.f32.mrb[0].mxu0
    %v292 = vadd.f32 0.0, %v291
    %v293 = vpop.f32.mrb[0].mxu0
    %294 = vdwg.mxu0
    %v295 = vadd.f32 %v214, %v287
    %v296 = vadd.f32 %v215, %v292
    %297 = vst.msk [vmem:[#allocation3] sm:$0xff] %vm211, %v295
    %298 = vst.msk [vmem:[#allocation3 + $0x8] sm:$0xff] %vm211, %v296
    // Predicated region
    $region46: #{decoder_layer.12} parent=1 // pred_check
      %p299 = pneg %p87
    $region47: #{decoder_layer.12} parent=1 // pred_check_branch
      %301 = sbr.rel (%p299) target = $region49
    $region48: #{decoder_layer.12} parent=1 // pred_region
      %v302 = vld [vmem:[#allocation2] sm:$0xff]
      %v303 = vld [vmem:[#allocation2 + $0x8] sm:$0xff]
      %v304 = vxor.u32 %v302, 2147483648
      %v305 = vxor.u32 %v303, 2147483648
      %v306 = vmul.f32 %v304, 1.442695
      %v307 = vpow.pop %v306
      %v308 = vmul.f32 %v305, 1.442695
      %v309 = vpow.pop %v308
      %v310 = vadd.f32 %v307, 1.0
      %v311 = vadd.f32 %v309, 1.0
      %v312 = vrcp.pop %v310
      %v313 = vmul.f32 1.0, %v312
      %v314 = vrcp.pop %v311
      %v315 = vmul.f32 1.0, %v314
      %v316 = vmul.f32 %v302, %v313
      %v317 = vmul.f32 %v303, %v315
      %v318 = vld [vmem:[#allocation3] sm:$0xff]
      %v319 = vld [vmem:[#allocation3 + $0x8] sm:$0xff]
      %v320 = vmul.f32 %v316, %v318
      %v321 = vmul.f32 %v317, %v319
      %322 = vst.msk [vmem:[#allocation13] sm:$0xff] %vm211, %v320
      %323 = vst.msk [vmem:[#allocation13 + $0x8] sm:$0xff] %vm211, %v321
    $region49: #{decoder_layer.12} parent=1 // pred_fallthru
      _
    // Predicated region
    $region50: #{decoder_layer.12} parent=1 // pred_check
      _
    $region51: #{decoder_layer.12} parent=1 // pred_check_branch
      %325 = sbr.rel (0) target = $region53
    $region52: #{decoder_layer.12} parent=1 // pred_region
      %s327 = ssub.s32 256, 256
      %328 = vsyncadd [#allocation6], %s327
      %s329 = sshll.u32 [#allocation13], 4
      %s330 = int_to_ptr.vmem [resolvable:$true] %s329
      %335 = dma.vmem_to_hbm [thread:$0]  %s330, 256, %s5, [#allocation6], 128, 128, 8
    $region53: #{decoder_layer.12} parent=1 // pred_fallthru
      _
    // Predicated region
    $region54: #{decoder_layer.12} parent=1 // pred_check
      _
    $region55: #{decoder_layer.12} parent=1 // pred_check_branch
      %337 = sbr.rel (0) target = $region57
    $region56: #{decoder_layer.12} parent=1 // pred_region
      %338 = dma.done [#allocation6], 256
    $region57: #{decoder_layer.12} parent=1 // pred_fallthru
      _
    %339 = vsyncpa [#allocation5], 1
    %340 = vsyncpa [#allocation8], 1
    %341 = vsyncpa [#allocation11], 1
    %342 = vsyncpa [#allocation6], 1

// kernel: decoder_layer.10
$region0: #{decoder_layer.10}
  #allocation0 [shape = 'u32[]', space=smem, size = 0x4, offset = 0x4, fixed_abs, tag = 'smem constant byte address 0x4 - core index']
  #allocation1 [shape = 'u32[144,128]{1,0:T(1,128)}', space=vmem, size = 0x12000, scoped, tag = 'internal scratch']
  #allocation2 [shape = 'f32[16,32]{1,0:T(8,128)}', space=vmem, size = 0x2000, scoped, tag = 'scratch operand']
  %s0 = inlined_call_operand.hbm [shape: f32[16,32], index: 0, kind: input, shape index: {}]
  %s1 = inlined_call_operand.hbm [shape: f32[32,32], index: 1, kind: input, shape index: {}]
  %s2 = inlined_call_operand.hbm [shape: f32[16,32], index: 2, kind: input, shape index: {}]
  %s3 = inlined_call_operand.hbm [shape: f32[16,32], index: 3, kind: output, shape index: {}]
  %s4 = sld [smem:[#allocation0]]
  $region42: #{decoder_layer.10} parent=0
    _
  %s6 = ssub.s32 1, %s4
  %s7 = scalar_select 0, %s6, %s4
  $region1: #{decoder_layer.10} parent=0
    #allocation3 [shape = 'u8[8192]{0}', space=vmem, size = 0x2000, scoped, tag = 'input window, operand 0, single buffered']
    #allocation4 [shape = 's32[1]{0}', space=sflag, size = 0x4, scoped, tag = 'scoped memory for decoder_layer.10']
    #allocation5 [shape = 's32[1]{0}', space=sflag, size = 0x4, scoped, tag = 'scoped memory for decoder_layer.10']
    #allocation6 [shape = 'u8[16384]{0}', space=vmem, size = 0x4000, scoped, tag = 'input window, operand 1, single buffered']
    #allocation7 [shape = 's32[1]{0}', space=sflag, size = 0x4, scoped, tag = 'scoped memory for decoder_layer.10']
    #allocation8 [shape = 'u8[8192]{0}', space=vmem, size = 0x2000, scoped, tag = 'input window, operand 2, single buffered']
    #allocation9 [shape = 'u8[8192]{0}', space=vmem, size = 0x2000, scoped, tag = 'output window, operand 0, single buffered']
    %8 = vsyncpa [#allocation4], 0
    %9 = vsyncpa [#allocation7], 0
    %10 = vsyncpa [#allocation5], 0
    // Predicated region
    $region2: #{decoder_layer.10} parent=1 // pred_check
      _
    $region3: #{decoder_layer.10} parent=1 // pred_check_branch
      %12 = sbr.rel (0) target = $region5
    $region4: #{decoder_layer.10} parent=1 // pred_region
      %s14 = ssub.s32 256, 256
      %15 = vsyncadd [#allocation4], %s14
      %s16 = sshll.u32 [#allocation3], 4
      %s17 = int_to_ptr.vmem [resolvable:$true] %s16
      %22 = dma.hbm_to_vmem [thread:$0]  %s0, 256, %s17, [#allocation4], 128, 128, 8
    $region5: #{decoder_layer.10} parent=1 // pred_fallthru
      _
    // Predicated region
    $region6: #{decoder_layer.10} parent=1 // pred_check
      _
    $region7: #{decoder_layer.10} parent=1 // pred_check_branch
      %24 = sbr.rel (0) target = $region9
    $region8: #{decoder_layer.10} parent=1 // pred_region
      %s26 = ssub.s32 512, 512
      %27 = vsyncadd [#allocation7], %s26
      %s28 = sshll.u32 [#allocation6], 4
      %s29 = int_to_ptr.vmem [resolvable:$true] %s28
      %34 = dma.hbm_to_vmem [thread:$0]  %s1, 512, %s29, [#allocation7], 128, 128, 8
    $region9: #{decoder_layer.10} parent=1 // pred_fallthru
      _
    // Predicated region
    $region10: #{decoder_layer.10} parent=1 // pred_check
      _
    $region11: #{decoder_layer.10} parent=1 // pred_check_branch
      %36 = sbr.rel (0) target = $region13
    $region12: #{decoder_layer.10} parent=1 // pred_region
      %s38 = ssub.s32 256, 256
      %39 = vsyncadd [#allocation7], %s38
      %s40 = sshll.u32 [#allocation8], 4
      %s41 = int_to_ptr.vmem [resolvable:$true] %s40
      %46 = dma.hbm_to_vmem [thread:$0]  %s2, 256, %s41, [#allocation7], 128, 128, 8
    $region13: #{decoder_layer.10} parent=1 // pred_fallthru
      _
    // Predicated region
    $region14: #{decoder_layer.10} parent=1 // pred_check
      _
    $region15: #{decoder_layer.10} parent=1 // pred_check_branch
      %48 = sbr.rel (0) target = $region17
    $region16: #{decoder_layer.10} parent=1 // pred_region
      %49 = dma.done [#allocation4], 256
    $region17: #{decoder_layer.10} parent=1 // pred_fallthru
      _
    // Predicated region
    $region18: #{decoder_layer.10} parent=1 // pred_check
      _
    $region19: #{decoder_layer.10} parent=1 // pred_check_branch
      %51 = sbr.rel (0) target = $region21
    $region20: #{decoder_layer.10} parent=1 // pred_region
      %52 = dma.done [#allocation7], 512
    $region21: #{decoder_layer.10} parent=1 // pred_fallthru
      _
    // Predicated region
    $region22: #{decoder_layer.10} parent=1 // pred_check
      _
    $region23: #{decoder_layer.10} parent=1 // pred_check_branch
      %54 = sbr.rel (0) target = $region25
    $region24: #{decoder_layer.10} parent=1 // pred_region
      %55 = dma.done [#allocation7], 256
    $region25: #{decoder_layer.10} parent=1 // pred_fallthru
      _
    %p56 = scmp.eq.s32.totalorder 0, 0
    // Predicated region
    $region26: #{decoder_layer.10} parent=1 // pred_check
      %p57 = pneg %p56
    $region27: #{decoder_layer.10} parent=1 // pred_check_branch
      %59 = sbr.rel (%p57) target = $region29
    $region28: #{decoder_layer.10} parent=1 // pred_region
      %vm60 = vcmask 261120
      %61 = vst.msk [vmem:[#allocation2] sm:$0xff] %vm60, 0.0
      %62 = vst.msk [vmem:[#allocation2 + $0x8] sm:$0xff] %vm60, 0.0
    $region29: #{decoder_layer.10} parent=1 // pred_fallthru
      _
    %v63 = vld [vmem:[#allocation2] sm:$0xff]
    %v64 = vld [vmem:[#allocation2 + $0x8] sm:$0xff]
    %v65 = vld [vmem:[#allocation3] sm:$0xff]
    %v66 = vld [vmem:[#allocation3 + $0x8] sm:$0xff]
    %v67 = vld [vmem:[#allocation6] sm:$0xff]
    %v68 = vld [vmem:[#allocation6 + $0x8] sm:$0xff]
    %v69 = vld [vmem:[#allocation6 + $0x10] sm:$0xff]
    %v70 = vld [vmem:[#allocation6 + $0x18] sm:$0xff]
    %vm71 = vcmask 261120
    %v73 = vsel %vm71, %v65, 0
    %v76 = vsel %vm71, %v66, 0
    %78 = vmatprep.subr.mxu0 0.0
    %79 = vmatpush1.msra.mxu0 %v67
    %80 = vmatprep.subr.mxu0 0.0
    %81 = vmatpush1.msra.mxu0 %v68
    %82 = vmatprep.subr.mxu0 0.0
    %83 = vmatpush1.msra.mxu0 %v69
    %84 = vmatprep.subr.mxu0 0.0
    %85 = vmatpush1.msra.mxu0 %v70
    %86 = vmatprep.subr.mxu0 0.0
    %87 = vmatpush1.msra.mxu0 0.0
    %88 = vmatprep.subr.mxu0 0.0
    %89 = vmatpush1.msra.mxu0 0.0
    %90 = vmatprep.subr.mxu0 0.0
    %91 = vmatpush1.msra.mxu0 0.0
    %92 = vmatprep.subr.mxu0 0.0
    %93 = vmatpush1.msra.mxu0 0.0
    %94 = vmatprep.subr.mxu0 0.0
    %95 = vmatpush1.msra.mxu0 0.0
    %96 = vmatprep.subr.mxu0 0.0
    %97 = vmatpush1.msra.mxu0 0.0
    %98 = vmatprep.subr.mxu0 0.0
    %99 = vmatpush1.msra.mxu0 0.0
    %100 = vmatprep.subr.mxu0 0.0
    %101 = vmatpush1.msra.mxu0 0.0
    %102 = vmatprep.subr.mxu0 0.0
    %103 = vmatpush1.msra.mxu0 0.0
    %104 = vmatprep.subr.mxu0 0.0
    %105 = vmatpush1.msra.mxu0 0.0
    %106 = vmatprep.subr.mxu0 0.0
    %107 = vmatpush1.msra.mxu0 0.0
    %108 = vmatprep.subr.mxu0 0.0
    %109 = vmatpush1.msra.mxu0 0.0
    %110 = vmatprep.subr.mxu0 0.0
    %111 = vmatpush1.msra.mxu0 0.0
    %112 = vmatprep.subr.mxu0 0.0
    %113 = vmatpush1.msra.mxu0 0.0
    %114 = vmatprep.subr.mxu0 0.0
    %115 = vmatpush1.msra.mxu0 0.0
    %116 = vmatprep.subr.mxu0 0.0
    %117 = vmatpush1.msra.mxu0 0.0
    %118 = vmatprep.subr.mxu0 0.0
    %119 = vmatpush1.msra.mxu0 0.0
    %120 = vmatprep.subr.mxu0 0.0
    %121 = vmatpush1.msra.mxu0 0.0
    %122 = vmatprep.subr.mxu0 0.0
    %123 = vmatpush1.msra.mxu0 0.0
    %124 = vmatprep.subr.mxu0 0.0
    %125 = vmatpush1.msra.mxu0 0.0
    %126 = vmatprep.subr.mxu0 0.0
    %127 = vmatpush1.msra.mxu0 0.0
    %128 = vmatprep.subr.mxu0 0.0
    %129 = vmatpush1.msra.mxu0 0.0
    %130 = vmatprep.subr.mxu0 0.0
    %131 = vmatpush1.msra.mxu0 0.0
    %132 = vmatprep.subr.mxu0 0.0
    %133 = vmatpush1.msra.mxu0 0.0
    %134 = vmatprep.subr.mxu0 0.0
    %135 = vmatpush1.msra.mxu0 0.0
    %136 = vmatprep.subr.mxu0 0.0
    %137 = vmatpush1.msra.mxu0 0.0
    %138 = vmatprep.subr.mxu0 0.0
    %139 = vmatpush1.msra.mxu0 0.0
    %140 = vmatprep.subr.mxu0 0.0
    %141 = vmatpush1.msra.mxu0 0.0
    %142 = vmatprep.mubr.f32.mxu0 0.0
    %143 = vmatmul.mubr.f32.gmra.mrb[0].mxu0 %v73
    %v144 = vpop.f32.mrb[0].mxu0
    %v145 = vadd.f32 0.0, %v144
    %v146 = vpop.f32.mrb[0].mxu0
    %147 = vmatprep.mubr.f32.mxu0 0.0
    %148 = vmatmul.mubr.f32.gmra.mrb[0].mxu0 %v76
    %v149 = vpop.f32.mrb[0].mxu0
    %v150 = vadd.f32 0.0, %v149
    %v151 = vpop.f32.mrb[0].mxu0
    %152 = vdwg.mxu0
    %v153 = vadd.f32 %v63, %v145
    %v154 = vadd.f32 %v64, %v150
    %155 = vst.msk [vmem:[#allocation2] sm:$0xff] %vm71, %v153
    %156 = vst.msk [vmem:[#allocation2 + $0x8] sm:$0xff] %vm71, %v154
    // Predicated region
    $region30: #{decoder_layer.10} parent=1 // pred_check
      %p157 = pneg %p56
    $region31: #{decoder_layer.10} parent=1 // pred_check_branch
      %159 = sbr.rel (%p157) target = $region33
    $region32: #{decoder_layer.10} parent=1 // pred_region
      %v160 = vld [vmem:[#allocation2] sm:$0xff]
      %v161 = vld [vmem:[#allocation2 + $0x8] sm:$0xff]
      %v162 = vld [vmem:[#allocation8] sm:$0xff]
      %v163 = vld [vmem:[#allocation8 + $0x8] sm:$0xff]
      %v164 = vadd.f32 %v160, %v162
      %v165 = vadd.f32 %v161, %v163
      %166 = vst.msk [vmem:[#allocation9] sm:$0xff] %vm71, %v164
      %167 = vst.msk [vmem:[#allocation9 + $0x8] sm:$0xff] %vm71, %v165
    $region33: #{decoder_layer.10} parent=1 // pred_fallthru
      _
    // Predicated region
    $region34: #{decoder_layer.10} parent=1 // pred_check
      _
    $region35: #{decoder_layer.10} parent=1 // pred_check_branch
      %169 = sbr.rel (0) target = $region37
    $region36: #{decoder_layer.10} parent=1 // pred_region
      %s171 = ssub.s32 256, 256
      %172 = vsyncadd [#allocation5], %s171
      %s173 = sshll.u32 [#allocation9], 4
      %s174 = int_to_ptr.vmem [resolvable:$true] %s173
      %179 = dma.vmem_to_hbm [thread:$0]  %s174, 256, %s3, [#allocation5], 128, 128, 8
    $region37: #{decoder_layer.10} parent=1 // pred_fallthru
      _
    // Predicated region
    $region38: #{decoder_layer.10} parent=1 // pred_check
      _
    $region39: #{decoder_layer.10} parent=1 // pred_check_branch
      %181 = sbr.rel (0) target = $region41
    $region40: #{decoder_layer.10} parent=1 // pred_region
      %182 = dma.done [#allocation5], 256
    $region41: #{decoder_layer.10} parent=1 // pred_fallthru
      _
    %183 = vsyncpa [#allocation4], 1
    %184 = vsyncpa [#allocation7], 1
    %185 = vsyncpa [#allocation5], 1

// kernel: decoder_layer.13
$region0: #{decoder_layer.13}
  #allocation0 [shape = 'u32[]', space=smem, size = 0x4, offset = 0x4, fixed_abs, tag = 'smem constant byte address 0x4 - core index']
  #allocation1 [shape = 'u32[144,128]{1,0:T(1,128)}', space=vmem, size = 0x12000, scoped, tag = 'internal scratch']
  #allocation2 [shape = 'f32[16,32]{1,0:T(8,128)}', space=vmem, size = 0x2000, scoped, tag = 'scratch operand']
  %s0 = inlined_call_operand.hbm [shape: f32[16,64], index: 0, kind: input, shape index: {}]
  %s1 = inlined_call_operand.hbm [shape: f32[64,32], index: 1, kind: input, shape index: {}]
  %s2 = inlined_call_operand.hbm [shape: f32[16,32], index: 2, kind: input, shape index: {}]
  %s3 = inlined_call_operand.hbm [shape: f32[16,32], index: 3, kind: output, shape index: {}]
  %s4 = sld [smem:[#allocation0]]
  $region42: #{decoder_layer.13} parent=0
    _
  %s6 = ssub.s32 1, %s4
  %s7 = scalar_select 0, %s6, %s4
  $region1: #{decoder_layer.13} parent=0
    #allocation3 [shape = 'u8[8192]{0}', space=vmem, size = 0x2000, scoped, tag = 'input window, operand 0, single buffered']
    #allocation4 [shape = 's32[1]{0}', space=sflag, size = 0x4, scoped, tag = 'scoped memory for decoder_layer.13']
    #allocation5 [shape = 's32[1]{0}', space=sflag, size = 0x4, scoped, tag = 'scoped memory for decoder_layer.13']
    #allocation6 [shape = 'u8[32768]{0}', space=vmem, size = 0x8000, scoped, tag = 'input window, operand 1, single buffered']
    #allocation7 [shape = 's32[1]{0}', space=sflag, size = 0x4, scoped, tag = 'scoped memory for decoder_layer.13']
    #allocation8 [shape = 'u8[8192]{0}', space=vmem, size = 0x2000, scoped, tag = 'input window, operand 2, single buffered']
    #allocation9 [shape = 'u8[8192]{0}', space=vmem, size = 0x2000, scoped, tag = 'output window, operand 0, single buffered']
    %8 = vsyncpa [#allocation4], 0
    %9 = vsyncpa [#allocation7], 0
    %10 = vsyncpa [#allocation5], 0
    // Predicated region
    $region2: #{decoder_layer.13} parent=1 // pred_check
      _
    $region3: #{decoder_layer.13} parent=1 // pred_check_branch
      %12 = sbr.rel (0) target = $region5
    $region4: #{decoder_layer.13} parent=1 // pred_region
      %s14 = ssub.s32 256, 256
      %15 = vsyncadd [#allocation4], %s14
      %s16 = sshll.u32 [#allocation3], 4
      %s17 = int_to_ptr.vmem [resolvable:$true] %s16
      %22 = dma.hbm_to_vmem [thread:$0]  %s0, 256, %s17, [#allocation4], 128, 128, 8
    $region5: #{decoder_layer.13} parent=1 // pred_fallthru
      _
    // Predicated region
    $region6: #{decoder_layer.13} parent=1 // pred_check
      _
    $region7: #{decoder_layer.13} parent=1 // pred_check_branch
      %24 = sbr.rel (0) target = $region9
    $region8: #{decoder_layer.13} parent=1 // pred_region
      %s26 = ssub.s32 1024, 1024
      %27 = vsyncadd [#allocation7], %s26
      %s28 = sshll.u32 [#allocation6], 4
      %s29 = int_to_ptr.vmem [resolvable:$true] %s28
      %34 = dma.hbm_to_vmem [thread:$0]  %s1, 1024, %s29, [#allocation7], 128, 128, 8
    $region9: #{decoder_layer.13} parent=1 // pred_fallthru
      _
    // Predicated region
    $region10: #{decoder_layer.13} parent=1 // pred_check
      _
    $region11: #{decoder_layer.13} parent=1 // pred_check_branch
      %36 = sbr.rel (0) target = $region13
    $region12: #{decoder_layer.13} parent=1 // pred_region
      %s38 = ssub.s32 256, 256
      %39 = vsyncadd [#allocation7], %s38
      %s40 = sshll.u32 [#allocation8], 4
      %s41 = int_to_ptr.vmem [resolvable:$true] %s40
      %46 = dma.hbm_to_vmem [thread:$0]  %s2, 256, %s41, [#allocation7], 128, 128, 8
    $region13: #{decoder_layer.13} parent=1 // pred_fallthru
      _
    // Predicated region
    $region14: #{decoder_layer.13} parent=1 // pred_check
      _
    $region15: #{decoder_layer.13} parent=1 // pred_check_branch
      %48 = sbr.rel (0) target = $region17
    $region16: #{decoder_layer.13} parent=1 // pred_region
      %49 = dma.done [#allocation4], 256
    $region17: #{decoder_layer.13} parent=1 // pred_fallthru
      _
    // Predicated region
    $region18: #{decoder_layer.13} parent=1 // pred_check
      _
    $region19: #{decoder_layer.13} parent=1 // pred_check_branch
      %51 = sbr.rel (0) target = $region21
    $region20: #{decoder_layer.13} parent=1 // pred_region
      %52 = dma.done [#allocation7], 1024
    $region21: #{decoder_layer.13} parent=1 // pred_fallthru
      _
    // Predicated region
    $region22: #{decoder_layer.13} parent=1 // pred_check
      _
    $region23: #{decoder_layer.13} parent=1 // pred_check_branch
      %54 = sbr.rel (0) target = $region25
    $region24: #{decoder_layer.13} parent=1 // pred_region
      %55 = dma.done [#allocation7], 256
    $region25: #{decoder_layer.13} parent=1 // pred_fallthru
      _
    %p56 = scmp.eq.s32.totalorder 0, 0
    // Predicated region
    $region26: #{decoder_layer.13} parent=1 // pred_check
      %p57 = pneg %p56
    $region27: #{decoder_layer.13} parent=1 // pred_check_branch
      %59 = sbr.rel (%p57) target = $region29
    $region28: #{decoder_layer.13} parent=1 // pred_region
      %vm60 = vcmask 261120
      %61 = vst.msk [vmem:[#allocation2] sm:$0xff] %vm60, 0.0
      %62 = vst.msk [vmem:[#allocation2 + $0x8] sm:$0xff] %vm60, 0.0
    $region29: #{decoder_layer.13} parent=1 // pred_fallthru
      _
    %v63 = vld [vmem:[#allocation2] sm:$0xff]
    %v64 = vld [vmem:[#allocation2 + $0x8] sm:$0xff]
    %v65 = vld [vmem:[#allocation3] sm:$0xff]
    %v66 = vld [vmem:[#allocation3 + $0x8] sm:$0xff]
    %v67 = vld [vmem:[#allocation6] sm:$0xff]
    %v68 = vld [vmem:[#allocation6 + $0x8] sm:$0xff]
    %v69 = vld [vmem:[#allocation6 + $0x10] sm:$0xff]
    %v70 = vld [vmem:[#allocation6 + $0x18] sm:$0xff]
    %v71 = vld [vmem:[#allocation6 + $0x20] sm:$0xff]
    %v72 = vld [vmem:[#allocation6 + $0x28] sm:$0xff]
    %v73 = vld [vmem:[#allocation6 + $0x30] sm:$0xff]
    %v74 = vld [vmem:[#allocation6 + $0x38] sm:$0xff]
    %vm75 = vcmask 523264
    %v77 = vsel %vm75, %v65, 0
    %v80 = vsel %vm75, %v66, 0
    %82 = vmatprep.subr.mxu0 0.0
    %83 = vmatpush1.msra.mxu0 %v67
    %84 = vmatprep.subr.mxu0 0.0
    %85 = vmatpush1.msra.mxu0 %v68
    %86 = vmatprep.subr.mxu0 0.0
    %87 = vmatpush1.msra.mxu0 %v69
    %88 = vmatprep.subr.mxu0 0.0
    %89 = vmatpush1.msra.mxu0 %v70
    %90 = vmatprep.subr.mxu0 0.0
    %91 = vmatpush1.msra.mxu0 %v71
    %92 = vmatprep.subr.mxu0 0.0
    %93 = vmatpush1.msra.mxu0 %v72
    %94 = vmatprep.subr.mxu0 0.0
    %95 = vmatpush1.msra.mxu0 %v73
    %96 = vmatprep.subr.mxu0 0.0
    %97 = vmatpush1.msra.mxu0 %v74
    %98 = vmatprep.subr.mxu0 0.0
    %99 = vmatpush1.msra.mxu0 0.0
    %100 = vmatprep.subr.mxu0 0.0
    %101 = vmatpush1.msra.mxu0 0.0
    %102 = vmatprep.subr.mxu0 0.0
    %103 = vmatpush1.msra.mxu0 0.0
    %104 = vmatprep.subr.mxu0 0.0
    %105 = vmatpush1.msra.mxu0 0.0
    %106 = vmatprep.subr.mxu0 0.0
    %107 = vmatpush1.msra.mxu0 0.0
    %108 = vmatprep.subr.mxu0 0.0
    %109 = vmatpush1.msra.mxu0 0.0
    %110 = vmatprep.subr.mxu0 0.0
    %111 = vmatpush1.msra.mxu0 0.0
    %112 = vmatprep.subr.mxu0 0.0
    %113 = vmatpush1.msra.mxu0 0.0
    %114 = vmatprep.subr.mxu0 0.0
    %115 = vmatpush1.msra.mxu0 0.0
    %116 = vmatprep.subr.mxu0 0.0
    %117 = vmatpush1.msra.mxu0 0.0
    %118 = vmatprep.subr.mxu0 0.0
    %119 = vmatpush1.msra.mxu0 0.0
    %120 = vmatprep.subr.mxu0 0.0
    %121 = vmatpush1.msra.mxu0 0.0
    %122 = vmatprep.subr.mxu0 0.0
    %123 = vmatpush1.msra.mxu0 0.0
    %124 = vmatprep.subr.mxu0 0.0
    %125 = vmatpush1.msra.mxu0 0.0
    %126 = vmatprep.subr.mxu0 0.0
    %127 = vmatpush1.msra.mxu0 0.0
    %128 = vmatprep.subr.mxu0 0.0
    %129 = vmatpush1.msra.mxu0 0.0
    %130 = vmatprep.subr.mxu0 0.0
    %131 = vmatpush1.msra.mxu0 0.0
    %132 = vmatprep.subr.mxu0 0.0
    %133 = vmatpush1.msra.mxu0 0.0
    %134 = vmatprep.subr.mxu0 0.0
    %135 = vmatpush1.msra.mxu0 0.0
    %136 = vmatprep.subr.mxu0 0.0
    %137 = vmatpush1.msra.mxu0 0.0
    %138 = vmatprep.subr.mxu0 0.0
    %139 = vmatpush1.msra.mxu0 0.0
    %140 = vmatprep.subr.mxu0 0.0
    %141 = vmatpush1.msra.mxu0 0.0
    %142 = vmatprep.subr.mxu0 0.0
    %143 = vmatpush1.msra.mxu0 0.0
    %144 = vmatprep.subr.mxu0 0.0
    %145 = vmatpush1.msra.mxu0 0.0
    %146 = vmatprep.mubr.f32.mxu0 0.0
    %147 = vmatmul.mubr.f32.gmra.mrb[0].mxu0 %v77
    %v148 = vpop.f32.mrb[0].mxu0
    %v149 = vadd.f32 0.0, %v148
    %v150 = vpop.f32.mrb[0].mxu0
    %151 = vmatprep.mubr.f32.mxu0 0.0
    %152 = vmatmul.mubr.f32.gmra.mrb[0].mxu0 %v80
    %v153 = vpop.f32.mrb[0].mxu0
    %v154 = vadd.f32 0.0, %v153
    %v155 = vpop.f32.mrb[0].mxu0
    %156 = vdwg.mxu0
    %v157 = vadd.f32 %v63, %v149
    %v158 = vadd.f32 %v64, %v154
    %vm159 = vcmask 261120
    %160 = vst.msk [vmem:[#allocation2] sm:$0xff] %vm159, %v157
    %161 = vst.msk [vmem:[#allocation2 + $0x8] sm:$0xff] %vm159, %v158
    // Predicated region
    $region30: #{decoder_layer.13} parent=1 // pred_check
      %p162 = pneg %p56
    $region31: #{decoder_layer.13} parent=1 // pred_check_branch
      %164 = sbr.rel (%p162) target = $region33
    $region32: #{decoder_layer.13} parent=1 // pred_region
      %v165 = vld [vmem:[#allocation2] sm:$0xff]
      %v166 = vld [vmem:[#allocation2 + $0x8] sm:$0xff]
      %v167 = vld [vmem:[#allocation8] sm:$0xff]
      %v168 = vld [vmem:[#allocation8 + $0x8] sm:$0xff]
      %v169 = vadd.f32 %v165, %v167
      %v170 = vadd.f32 %v166, %v168
      %171 = vst.msk [vmem:[#allocation9] sm:$0xff] %vm159, %v169
      %172 = vst.msk [vmem:[#allocation9 + $0x8] sm:$0xff] %vm159, %v170
    $region33: #{decoder_layer.13} parent=1 // pred_fallthru
      _
    // Predicated region
    $region34: #{decoder_layer.13} parent=1 // pred_check
      _
    $region35: #{decoder_layer.13} parent=1 // pred_check_branch
      %174 = sbr.rel (0) target = $region37
    $region36: #{decoder_layer.13} parent=1 // pred_region
      %s176 = ssub.s32 256, 256
      %177 = vsyncadd [#allocation5], %s176
      %s178 = sshll.u32 [#allocation9], 4
      %s179 = int_to_ptr.vmem [resolvable:$true] %s178
      %184 = dma.vmem_to_hbm [thread:$0]  %s179, 256, %s3, [#allocation5], 128, 128, 8
    $region37: #{decoder_layer.13} parent=1 // pred_fallthru
      _
    // Predicated region
    $region38: #{decoder_layer.13} parent=1 // pred_check
      _
    $region39: #{decoder_layer.13} parent=1 // pred_check_branch
      %186 = sbr.rel (0) target = $region41
    $region40: #{decoder_layer.13} parent=1 // pred_region
      %187 = dma.done [#allocation5], 256
    $region41: #{decoder_layer.13} parent=1 // pred_fallthru
      _
    %188 = vsyncpa [#allocation4], 1
    %189 = vsyncpa [#allocation7], 1
    %190 = vsyncpa [#allocation5], 1

</llo_original>
